<compile_context>
chip_gen: v7x
topology: tpu7x:2x2x1
jax: 0.10.0
libtpu: 0.0.40
codegen_flags: <defaults>
</compile_context>

<pallas_src>
import jax
import jax.numpy as jnp
from jax import lax
from jax.experimental import pallas as pl
from jax.experimental.pallas import tpu as pltpu


# ------------------------- small math helpers (kernel-safe) -------------------------

def _silu(v):
    return v * (1.0 / (1.0 + jnp.exp(-v)))


def _softplus(v):
    return jnp.maximum(v, 0.0) + jnp.log(1.0 + jnp.exp(-jnp.abs(v)))


_CONV_LEAD = 8   # sublane-aligned lead rows of the conv slab holding the previous tail


# ------------------------------- Pallas kernel --------------------------------------

def _ssd_block_kernel(x_ref, w_in_ref, conv_w_ref, conv_b_ref, dt_bias_ref,
                      A_ref, skip_ref, rmsw_ref, w_out_ref, lnw_ref, lnb_ref,
                      hexp_ref,
                      out_ref,
                      state_scr, conv_scr, cumg_scr, cmldTg_scr, xsg_scr, yg_scr):
    T, _ = x_ref.shape
    d_in_proj = w_in_ref.shape[1]
    d_conv, conv_dim = conv_w_ref.shape
    H = A_ref.shape[1]
    d_inner = d_in_proj - conv_dim - H
    N = (conv_dim - d_inner) // 2
    P = d_inner // H
    HG, _, GL = yg_scr.shape          # head groups / lanes per group
    GH = GL // P                      # heads per group

    c = pl.program_id(1)              # sequence-chunk index

    # Reset the cross-chunk carries at the start of every batch element.
    @pl.when(c == 0)
    def _():
        state_scr[...] = jnp.zeros_like(state_scr)
        conv_scr[...] = jnp.zeros_like(conv_scr)

    x = x_ref[...]                                                   # (T, d_model) f32

    # ---- fused in_proj: one wide bf16 matmul, f32 accumulate ----
    proj = jnp.dot(x.astype(jnp.bfloat16), w_in_ref[...],
                   preferred_element_type=jnp.float32)               # (T, d_in_proj)
    z = proj[:, :d_inner]                                            # (T, d_inner)
    xbc = proj[:, d_inner:d_inner + conv_dim]                        # (T, conv_dim)
    dt = _softplus(proj[:, d_inner + conv_dim:] + dt_bias_ref[...])  # (T, H)

    # ---- causal depthwise conv via a VMEM slab (review item 9) ----
    # rows [off, off+d_conv-1) hold the previous chunk's tail; rows [_CONV_LEAD, +T)
    # hold this chunk's xBC (aligned store).  Windows are shifted ref loads.
    off = _CONV_LEAD - (d_conv - 1)
    conv_scr[pl.ds(_CONV_LEAD, T), :] = xbc
    conv = conv_b_ref[...]
    for k in range(d_conv):                                          # d_conv = 4, static
        conv = conv + conv_scr[pl.ds(off + k, T), :] * conv_w_ref[k:k + 1, :]
    # carry tail for the next chunk (written after this chunk's windows were read)
    conv_scr[pl.ds(off, d_conv - 1), :] = xbc[T - (d_conv - 1):, :]

    xbc_act = _silu(conv)
    xs = xbc_act[:, :d_inner]                                        # (T, d_inner)
    Bs = xbc_act[:, d_inner:d_inner + N]                             # (T, N)
    Cs = xbc_act[:, d_inner + N:]                                    # (T, N)
    Bs_b = Bs.astype(jnp.bfloat16)
    Cs_b = Cs.astype(jnp.bfloat16)
    xs_b = xs.astype(jnp.bfloat16)

    # ---- shared per-chunk SSD quantities ----
    ti = lax.broadcasted_iota(jnp.int32, (T, T), 0)
    si = lax.broadcasted_iota(jnp.int32, (T, T), 1)
    causal = ti >= si
    lower_incl = jnp.where(causal, 1.0, 0.0).astype(jnp.float32)     # 0/1 mask (exact)
    neg_mask = jnp.where(causal, 0.0, -1e30).astype(jnp.float32)     # additive mask (item 2)

    a = dt * A_ref[...]                                              # (T, H), all <= 0
    # exact inclusive cumsum of dt*A for ALL heads (0/1-mask f32 matmul; MXU has slack)
    cum = jnp.dot(lower_incl, a, preferred_element_type=jnp.float32)  # (T, H)
    cum_last = cum[T - 1:T, :]                                        # (1, H)
    hexp = hexp_ref[...]                                              # (H, d_inner) 0/1

    # C_t . B_s shared across heads (ngroups = 1): computed once per chunk.
    CB = lax.dot_general(Cs_b, Bs_b, (((1,), (1,)), ((), ())),
                         preferred_element_type=jnp.float32)          # (T, T)

    # ---- inter-chunk term + state update, batched over ALL heads (item 1) ----
    state_b = state_scr[...].astype(jnp.bfloat16)                     # (N, d_inner)
    y_inter = jnp.dot(Cs_b, state_b, preferred_element_type=jnp.float32)   # (T, d_inner)
    e_cum_rep = jnp.dot(jnp.exp(cum), hexp,
                        preferred_element_type=jnp.float32)           # (T, d_inner) (item 4)
    y_base = e_cum_rep * y_inter + skip_ref[...] * xs                 # (T, d_inner)

    # state carry:  S_new = exp(cum_last) * S + Bs^T @ (exp(cum_last - cum) * dt * xs)
    w_all = jnp.exp(cum_last - cum) * dt                              # (T, H), exponent <= 0
    w_rep = jnp.dot(w_all, hexp, preferred_element_type=jnp.float32)  # (T, d_inner)
    xw_b = (w_rep * xs).astype(jnp.bfloat16)
    inc = lax.dot_general(Bs_b, xw_b, (((0,), (0,)), ((), ())),
                          preferred_element_type=jnp.float32)         # (N, d_inner)
    e_last_rep = jnp.dot(jnp.exp(cum_last), hexp,
                         preferred_element_type=jnp.float32)          # (1, d_inner)
    state_scr[...] = e_last_rep * state_scr[...] + inc                # one full-slab store

    # ---- intra-chunk quadratic term: fori_loop over lane-aligned head groups (item 3) ----
    # dt_s is folded into the exponent:  M[t,s] = CB[t,s] * exp(cum_t - (cum_s - log dt_s)).
    cmldT = jnp.transpose(cum - jnp.log(dt))                          # (H, T)
    for g0 in range(HG):                                              # stage per-group slabs
        cumg_scr[g0] = cum[:, g0 * GH:(g0 + 1) * GH]
        cmldTg_scr[g0] = cmldT[g0 * GH:(g0 + 1) * GH, :]
        xsg_scr[g0] = xs_b[:, g0 * GL:(g0 + 1) * GL]

    def group_body(g, carry):
        cum_grp = cumg_scr[g]                                         # (T, GH) f32
        cmldT_grp = cmldTg_scr[g]                                     # (GH, T) f32
        x_grp = xsg_scr[g]                                            # (T, GL) bf16
        parts = []
        for j in range(GH):                                           # static, <= 4
            expo = cum_grp[:, j:j + 1] - cmldT_grp[j:j + 1, :] + neg_mask   # (T, T)
            M = (CB * jnp.exp(expo)).astype(jnp.bfloat16)             # (T, T) bf16
            parts.append(jnp.dot(M, x_grp[:, j * P:(j + 1) * P],
                                 preferred_element_type=jnp.float32))  # (T, P)
        yg_scr[g] = jnp.concatenate(parts, axis=-1)                   # lane-dense (T, GL)
        return carry

    lax.fori_loop(0, HG, group_body, 0)

    if HG > 1:
        y_intra = jnp.concatenate([yg_scr[g0] for g0 in range(HG)], axis=-1)
    else:
        y_intra = yg_scr[0]
    y = y_intra + y_base                                              # (T, d_inner)

    # ---- gated RMSNorm: rmsnorm(y * silu(z)) * weight ----
    g = y * _silu(z)
    g = g * lax.rsqrt(jnp.mean(g * g, axis=-1, keepdims=True) + 1e-5) * rmsw_ref[...]

    # ---- out_proj, residual, LayerNorm ----
    mamba_out = jnp.dot(g.astype(jnp.bfloat16), w_out_ref[...],
                        preferred_element_type=jnp.float32)
    res = mamba_out + x
    mu = jnp.mean(res, axis=-1, keepdims=True)
    var = jnp.mean((res - mu) * (res - mu), axis=-1, keepdims=True)
    out_ref[...] = (res - mu) * lax.rsqrt(var + 1e-5) * lnw_ref[...] + lnb_ref[...]


# ------------------------------- wrapper ---------------------------------------------

_PARAM_ORDER = ["w_in", "conv_w", "conv_b", "dt_bias", "A", "Dskip_rep",
                "rms_w", "w_out", "ln_w", "ln_b", "head_expand"]
_BF16_PARAMS = {"w_in", "w_out"}      # big MXU weights shipped to VMEM in bf16


def _pick_chunk(L, max_chunk):
    if L <= max_chunk:
        return L
    for t in range(max_chunk - max_chunk % 8, 7, -8):   # multiple of 8 (sublane tile)
        if L % t == 0:
            return t
    # Fallback: whole sequence as one chunk -- correct but O(L^2) VMEM; pad L instead
    # for long, divisor-free sequence lengths.
    return L


def state_space_duality_block(x, params, *, max_chunk=128, vmem_limit_bytes=None):
    B, L, Dm = x.shape
    d_in_proj = params["w_in"].shape[1]
    d_conv, conv_dim = params["conv_w"].shape
    H = params["A"].shape[1]
    d_inner = d_in_proj - conv_dim - H
    N = (conv_dim - d_inner) // 2
    P = d_inner // H
    assert d_inner % H == 0 and d_conv - 1 <= _CONV_LEAD and L >= d_conv

    T = _pick_chunk(L, max_chunk)
    assert L % T == 0 and T >= d_conv
    nc = L // T

    # Head grouping: as many heads per group as fit 128 lanes, dividing H exactly.
    GH = max(1, min(H, max(1, 128 // P)))
    while H % GH:
        GH -= 1
    GL = GH * P
    HG = H // GH

    # Host-side parameter prep (items 1/4): expand the per-head skip to lanes, and
    # build the constant (H, d_inner) head->lane expansion used for in-kernel repeats.
    full = dict(params)
    full["Dskip_rep"] = jnp.repeat(params["Dskip"], P, axis=1)             # (1, d_inner)
    full["head_expand"] = jnp.repeat(jnp.eye(H, dtype=jnp.float32), P, axis=1)  # (H, d_inner)

    plist = []
    in_specs = [pl.BlockSpec((None, T, Dm), lambda b, c: (b, c, 0))]
    for name in _PARAM_ORDER:
        p = full[name]
        if name in _BF16_PARAMS:
            p = p.astype(jnp.bfloat16)
        plist.append(p)
        # whole-array, single-buffered VMEM residency (item 5): no per-step
        # double-buffering of never-changing weight blocks.
        in_specs.append(pl.BlockSpec(memory_space=pltpu.MemorySpace.VMEM))

    return pl.pallas_call(
        _ssd_block_kernel,
        out_shape=jax.ShapeDtypeStruct((B, L, Dm), jnp.float32),
        grid_spec=pltpu.PrefetchScalarGridSpec(
            num_scalar_prefetch=0,
            grid=(B, nc),
            in_specs=in_specs,
            out_specs=pl.BlockSpec((None, T, Dm), lambda b, c: (b, c, 0)),
            scratch_shapes=[
                pltpu.VMEM((N, d_inner), jnp.float32),           # transposed SSD state carry
                pltpu.VMEM((_CONV_LEAD + T, conv_dim), jnp.float32),  # conv slab (tail rows 5..7)
                pltpu.VMEM((HG, T, GH), jnp.float32),            # per-group cum columns
                pltpu.VMEM((HG, GH, T), jnp.float32),            # per-group (cum - log dt)^T rows
                pltpu.VMEM((HG, T, GL), jnp.bfloat16),           # per-group x (intra-matmul RHS)
                pltpu.VMEM((HG, T, GL), jnp.float32),            # per-group intra-chunk y
            ],
        ),
        compiler_params=pltpu.CompilerParams(
            dimension_semantics=("parallel", "arbitrary"),
            vmem_limit_bytes=vmem_limit_bytes,
        ),
    )(x, *plist)


# ------------------------- deterministic parameter init ------------------------------

def init_params(key, d_model, headdim=32, d_state=64, d_conv=4, expand=2):
    d_inner = expand * d_model
    nheads = d_inner // headdim
    N = d_state                      # ngroups = 1
    conv_dim = d_inner + 2 * N
    d_in_proj = 2 * d_inner + 2 * N + nheads

    ks = jax.random.split(key, 8)
    w_in = jax.random.normal(ks[0], (d_model, d_in_proj), jnp.float32) / jnp.sqrt(float(d_model))
    conv_w = jax.random.normal(ks[1], (d_conv, conv_dim), jnp.float32) / jnp.sqrt(float(d_conv))
    conv_b = 0.1 * jax.random.normal(ks[2], (conv_dim,), jnp.float32)

    dt0 = jnp.linspace(0.01, 0.1, nheads).astype(jnp.float32)
    dt_bias = jnp.log(jnp.expm1(dt0))                     # inverse softplus
    A_log = jnp.log(jnp.linspace(1.0, 16.0, nheads)).astype(jnp.float32)
    A = -jnp.exp(A_log)                                   # (H,)
    Dskip = jnp.ones((nheads,), jnp.float32)

    rms_w = jnp.ones((d_inner,), jnp.float32) + 0.05 * jax.random.normal(ks[3], (d_inner,), jnp.float32)
    w_out = jax.random.normal(ks[4], (d_inner, d_model), jnp.float32) / jnp.sqrt(float(d_inner))
    ln_w = jnp.ones((d_model,), jnp.float32) + 0.05 * jax.random.normal(ks[5], (d_model,), jnp.float32)
    ln_b = 0.05 * jax.random.normal(ks[6], (d_model,), jnp.float32)

    return dict(
        w_in=w_in,                      # fused in_proj: [z | xBC | dt]
        conv_w=conv_w,                  # (d_conv, conv_dim), w[k,c] == torch_w[c,0,k]
        conv_b=conv_b[None, :],
        dt_bias=dt_bias[None, :],
        A=A[None, :],
        Dskip=Dskip[None, :],
        rms_w=rms_w[None, :],
        w_out=w_out,
        ln_w=ln_w[None, :],
        ln_b=ln_b[None, :],
    )


# ------------------------------ pure-JAX reference -----------------------------------

def reference_block(x, params, headdim):
    w_in = params["w_in"]
    conv_w = params["conv_w"]
    conv_b = params["conv_b"]
    d_conv, conv_dim = conv_w.shape
    H = params["A"].shape[1]
    d_in_proj = w_in.shape[1]
    d_inner = d_in_proj - conv_dim - H
    N = (conv_dim - d_inner) // 2
    P = headdim

    def conv(inp):
        L, C = inp.shape
        pad = jnp.concatenate([jnp.zeros((d_conv - 1, C), inp.dtype), inp], axis=0)
        out = conv_b
        for k in range(d_conv):
            out = out + pad[k:k + L, :] * conv_w[k:k + 1, :]
        return out

    def mamba_one(u):
        proj = u @ w_in
        z = proj[:, :d_inner]
        xbc = _silu(conv(proj[:, d_inner:d_inner + conv_dim]))
        dt = _softplus(proj[:, d_inner + conv_dim:] + params["dt_bias"])      # (L, H)
        xs = xbc[:, :d_inner]
        Bs = xbc[:, d_inner:d_inner + N]
        Cs = xbc[:, d_inner + N:]
        L = u.shape[0]
        A = params["A"][0]
        Dp = params["Dskip"][0]
        x3 = xs.reshape(L, H, P)

        def step(state, inp):
            x_t, B_t, C_t, dt_t = inp
            dA = jnp.exp(dt_t * A)                                            # (H,)
            state = state * dA[:, None, None] \
                + (dt_t[:, None] * x_t)[:, :, None] * B_t[None, None, :]
            y_t = jnp.einsum("hpn,n->hp", state, C_t) + Dp[:, None] * x_t
            return state, y_t

        state0 = jnp.zeros((H, P, N), jnp.float32)
        _, ys = lax.scan(step, state0, (x3, Bs, Cs, dt))
        y = ys.reshape(L, d_inner)
        g = y * _silu(z)
        g = g * lax.rsqrt(jnp.mean(g * g, axis=-1, keepdims=True) + 1e-5) * params["rms_w"]
        return g @ params["w_out"]

    mo = jax.vmap(mamba_one)(x)
    res = mo + x
    mu = jnp.mean(res, axis=-1, keepdims=True)
    var = jnp.mean((res - mu) ** 2, axis=-1, keepdims=True)
    return (res - mu) * lax.rsqrt(var + 1e-5) * params["ln_w"] + params["ln_b"]


# ----------------------------------- main ---------------------------------------------

if __name__ == "__main__":
    batch, seq, d_model, headdim = 2, 16, 32, 32
    key = jax.random.PRNGKey(0)
    k_x, k_p = jax.random.split(key)
    x = jax.random.normal(k_x, (batch, seq, d_model), jnp.float32)
    params = init_params(k_p, d_model, headdim=headdim)

    # max_chunk=8 -> two sequence chunks per batch element, exercising the SSD
    # state carry and the cross-chunk causal-conv tail.
    out = state_space_duality_block(x, params, max_chunk=8)
    out = jax.block_until_ready(out)

    ref = reference_block(x, params, headdim)
    assert out.shape == x.shape
    # bf16 MXU operands (f32 accumulation) vs. a pure-f32 sequential-scan reference.
    assert jnp.allclose(out, ref, rtol=5e-2, atol=5e-2), \
        f"max abs err {float(jnp.max(jnp.abs(out - ref)))}"
    print("KERNEL_OK")
</pallas_src>

<mosaic_0001>
module attributes {stable_mosaic.version = 11 : i64} {
  func.func @_ssd_block_kernel(%arg0: i32, %arg1: i32, %arg2: memref<1x8x32xf32, #tpu.memory_space<vmem>>, %arg3: memref<32x258xbf16, #tpu.memory_space<vmem>>, %arg4: memref<4x192xf32, #tpu.memory_space<vmem>>, %arg5: memref<1x192xf32, #tpu.memory_space<vmem>>, %arg6: memref<1x2xf32, #tpu.memory_space<vmem>>, %arg7: memref<1x2xf32, #tpu.memory_space<vmem>>, %arg8: memref<1x64xf32, #tpu.memory_space<vmem>>, %arg9: memref<1x64xf32, #tpu.memory_space<vmem>>, %arg10: memref<64x32xbf16, #tpu.memory_space<vmem>>, %arg11: memref<1x32xf32, #tpu.memory_space<vmem>>, %arg12: memref<1x32xf32, #tpu.memory_space<vmem>>, %arg13: memref<2x64xf32, #tpu.memory_space<vmem>>, %arg14: memref<1x8x32xf32, #tpu.memory_space<vmem>>, %arg15: memref<64x64xf32, #tpu.memory_space<vmem>>, %arg16: memref<16x192xf32, #tpu.memory_space<vmem>>, %arg17: memref<1x8x2xf32, #tpu.memory_space<vmem>>, %arg18: memref<1x2x8xf32, #tpu.memory_space<vmem>>, %arg19: memref<1x8x64xbf16, #tpu.memory_space<vmem>>, %arg20: memref<1x8x64xf32, #tpu.memory_space<vmem>>) attributes {dimension_semantics = [#tpu.dimension_semantics<parallel>, #tpu.dimension_semantics<arbitrary>], iteration_bounds = array<i64: 2, 2>, scalar_prefetch = 0 : i64, scratch_operands = 6 : i64, tpu.core_type = #tpu.core_type<tc>, window_params = [{transform_indices = @transform_0, window_bounds = array<i64: 1, 8, 32>}, {pipeline_mode = #tpu.pipeline_mode<synchronous>, transform_indices = @transform_1, window_bounds = array<i64: 32, 258>}, {pipeline_mode = #tpu.pipeline_mode<synchronous>, transform_indices = @transform_2, window_bounds = array<i64: 4, 192>}, {pipeline_mode = #tpu.pipeline_mode<synchronous>, transform_indices = @transform_3, window_bounds = array<i64: 1, 192>}, {pipeline_mode = #tpu.pipeline_mode<synchronous>, transform_indices = @transform_4, window_bounds = array<i64: 1, 2>}, {pipeline_mode = #tpu.pipeline_mode<synchronous>, transform_indices = @transform_5, window_bounds = array<i64: 1, 2>}, {pipeline_mode = #tpu.pipeline_mode<synchronous>, transform_indices = @transform_6, window_bounds = array<i64: 1, 64>}, {pipeline_mode = #tpu.pipeline_mode<synchronous>, transform_indices = @transform_7, window_bounds = array<i64: 1, 64>}, {pipeline_mode = #tpu.pipeline_mode<synchronous>, transform_indices = @transform_8, window_bounds = array<i64: 64, 32>}, {pipeline_mode = #tpu.pipeline_mode<synchronous>, transform_indices = @transform_9, window_bounds = array<i64: 1, 32>}, {pipeline_mode = #tpu.pipeline_mode<synchronous>, transform_indices = @transform_10, window_bounds = array<i64: 1, 32>}, {pipeline_mode = #tpu.pipeline_mode<synchronous>, transform_indices = @transform_11, window_bounds = array<i64: 2, 64>}, {transform_indices = @transform_12, window_bounds = array<i64: 1, 8, 32>}]} {
    %c0_i32 = arith.constant 0 : i32
    %0 = arith.cmpi eq, %arg1, %c0_i32 : i32
    %1 = arith.extui %0 : i1 to i32
    %c0_i32_0 = arith.constant 0 : i32
    %2 = arith.cmpi ne, %1, %c0_i32_0 : i32
    scf.if %2 {
      %cst_97 = arith.constant 0.000000e+00 : f32
      %210 = vector.broadcast %cst_97 : f32 to vector<64x64xf32>
      %c0_98 = arith.constant 0 : index
      %c0_99 = arith.constant 0 : index
      %211 = vector.load %arg15[%c0_98, %c0_99] : memref<64x64xf32, #tpu.memory_space<vmem>>, vector<64x64xf32>
      tpu.vector_store %arg15[%c0_98, %c0_99], %210 {strides = array<i32>} : memref<64x64xf32, #tpu.memory_space<vmem>>, vector<64x64xf32>,
      %cst_100 = arith.constant 0.000000e+00 : f32
      %212 = vector.broadcast %cst_100 : f32 to vector<16x192xf32>
      %c0_101 = arith.constant 0 : index
      %c0_102 = arith.constant 0 : index
      %213 = vector.load %arg16[%c0_101, %c0_102] : memref<16x192xf32, #tpu.memory_space<vmem>>, vector<16x192xf32>
      tpu.vector_store %arg16[%c0_101, %c0_102], %212 {strides = array<i32>} : memref<16x192xf32, #tpu.memory_space<vmem>>, vector<16x192xf32>,
    } else {
    }
    %c0 = arith.constant 0 : index
    %c0_1 = arith.constant 0 : index
    %c0_2 = arith.constant 0 : index
    %3 = vector.load %arg2[%c0, %c0_1, %c0_2] : memref<1x8x32xf32, #tpu.memory_space<vmem>>, vector<1x8x32xf32>
    %4 = vector.shape_cast %3 : vector<1x8x32xf32> to vector<8x32xf32>
    %5 = arith.truncf %4 : vector<8x32xf32> to vector<8x32xbf16>
    %c0_3 = arith.constant 0 : index
    %c0_4 = arith.constant 0 : index
    %6 = vector.load %arg3[%c0_3, %c0_4] : memref<32x258xbf16, #tpu.memory_space<vmem>>, vector<32x258xbf16>
    %cst = arith.constant dense<0.000000e+00> : vector<8x258xf32>
    %7 = tpu.matmul %5, %6, %cst {dimension_numbers = #tpu.dot_dimension_numbers<[1], [0], [0], [1], [0, 0, 1, 1], [], []>} : vector<8x32xbf16>, vector<32x258xbf16>, vector<8x258xf32> -> vector<8x258xf32>
    %8 = vector.extract_strided_slice %7 {offsets = [0, 0], sizes = [8, 64], strides = [1, 1]} : vector<8x258xf32> to vector<8x64xf32>
    %9 = vector.extract_strided_slice %7 {offsets = [0, 64], sizes = [8, 192], strides = [1, 1]} : vector<8x258xf32> to vector<8x192xf32>
    %10 = vector.extract_strided_slice %7 {offsets = [0, 256], sizes = [8, 2], strides = [1, 1]} : vector<8x258xf32> to vector<8x2xf32>
    %c0_5 = arith.constant 0 : index
    %c0_6 = arith.constant 0 : index
    %11 = vector.load %arg6[%c0_5, %c0_6] : memref<1x2xf32, #tpu.memory_space<vmem>>, vector<1x2xf32>
    %12 = vector.broadcast %11 : vector<1x2xf32> to vector<8x2xf32>
    %13 = arith.addf %10, %12 : vector<8x2xf32>
    %cst_7 = arith.constant 0.000000e+00 : f32
    %14 = vector.broadcast %cst_7 : f32 to vector<8x2xf32>
    %15 = arith.maximumf %13, %14 : vector<8x2xf32>
    %16 = math.absf %13 : vector<8x2xf32>
    %cst_8 = arith.constant 0.000000e+00 : f32
    %17 = vector.broadcast %cst_8 : f32 to vector<8x2xf32>
    %18 = arith.subf %17, %16 : vector<8x2xf32>
    %19 = math.exp %18 : vector<8x2xf32>
    %cst_9 = arith.constant 1.000000e+00 : f32
    %20 = vector.broadcast %cst_9 : f32 to vector<8x2xf32>
    %21 = arith.addf %20, %19 : vector<8x2xf32>
    %22 = math.log %21 : vector<8x2xf32>
    %23 = arith.addf %15, %22 : vector<8x2xf32>
    %c8 = arith.constant 8 : index
    %c0_10 = arith.constant 0 : index
    %24 = vector.load %arg16[%c8, %c0_10] : memref<16x192xf32, #tpu.memory_space<vmem>>, vector<8x192xf32>
    tpu.vector_store %arg16[%c8, %c0_10], %9 {strides = array<i32>} : memref<16x192xf32, #tpu.memory_space<vmem>>, vector<8x192xf32>,
    %c0_11 = arith.constant 0 : index
    %c0_12 = arith.constant 0 : index
    %25 = vector.load %arg5[%c0_11, %c0_12] : memref<1x192xf32, #tpu.memory_space<vmem>>, vector<1x192xf32>
    %c5 = arith.constant 5 : index
    %c0_13 = arith.constant 0 : index
    %26 = vector.load %arg16[%c5, %c0_13] : memref<16x192xf32, #tpu.memory_space<vmem>>, vector<8x192xf32>
    %c0_14 = arith.constant 0 : index
    %c0_15 = arith.constant 0 : index
    %27 = vector.load %arg4[%c0_14, %c0_15] : memref<4x192xf32, #tpu.memory_space<vmem>>, vector<1x192xf32>
    %28 = vector.broadcast %27 : vector<1x192xf32> to vector<8x192xf32>
    %29 = arith.mulf %26, %28 : vector<8x192xf32>
    %30 = vector.broadcast %25 : vector<1x192xf32> to vector<8x192xf32>
    %31 = arith.addf %30, %29 : vector<8x192xf32>
    %c6 = arith.constant 6 : index
    %c0_16 = arith.constant 0 : index
    %32 = vector.load %arg16[%c6, %c0_16] : memref<16x192xf32, #tpu.memory_space<vmem>>, vector<8x192xf32>
    %c1 = arith.constant 1 : index
    %c0_17 = arith.constant 0 : index
    %33 = vector.load %arg4[%c1, %c0_17] : memref<4x192xf32, #tpu.memory_space<vmem>>, vector<1x192xf32>
    %34 = vector.broadcast %33 : vector<1x192xf32> to vector<8x192xf32>
    %35 = arith.mulf %32, %34 : vector<8x192xf32>
    %36 = arith.addf %31, %35 : vector<8x192xf32>
    %c7 = arith.constant 7 : index
    %c0_18 = arith.constant 0 : index
    %37 = vector.load %arg16[%c7, %c0_18] : memref<16x192xf32, #tpu.memory_space<vmem>>, vector<8x192xf32>
    %c2 = arith.constant 2 : index
    %c0_19 = arith.constant 0 : index
    %38 = vector.load %arg4[%c2, %c0_19] : memref<4x192xf32, #tpu.memory_space<vmem>>, vector<1x192xf32>
    %39 = vector.broadcast %38 : vector<1x192xf32> to vector<8x192xf32>
    %40 = arith.mulf %37, %39 : vector<8x192xf32>
    %41 = arith.addf %36, %40 : vector<8x192xf32>
    %c8_20 = arith.constant 8 : index
    %c0_21 = arith.constant 0 : index
    %42 = vector.load %arg16[%c8_20, %c0_21] : memref<16x192xf32, #tpu.memory_space<vmem>>, vector<8x192xf32>
    %c3 = arith.constant 3 : index
    %c0_22 = arith.constant 0 : index
    %43 = vector.load %arg4[%c3, %c0_22] : memref<4x192xf32, #tpu.memory_space<vmem>>, vector<1x192xf32>
    %44 = vector.broadcast %43 : vector<1x192xf32> to vector<8x192xf32>
    %45 = arith.mulf %42, %44 : vector<8x192xf32>
    %46 = arith.addf %41, %45 : vector<8x192xf32>
    %47 = vector.extract_strided_slice %9 {offsets = [5, 0], sizes = [3, 192], strides = [1, 1]} : vector<8x192xf32> to vector<3x192xf32>
    %c5_23 = arith.constant 5 : index
    %c0_24 = arith.constant 0 : index
    %48 = vector.load %arg16[%c5_23, %c0_24] : memref<16x192xf32, #tpu.memory_space<vmem>>, vector<3x192xf32>
    tpu.vector_store %arg16[%c5_23, %c0_24], %47 {strides = array<i32>} : memref<16x192xf32, #tpu.memory_space<vmem>>, vector<3x192xf32>,
    %cst_25 = arith.constant 0.000000e+00 : f32
    %49 = vector.broadcast %cst_25 : f32 to vector<8x192xf32>
    %50 = arith.subf %49, %46 : vector<8x192xf32>
    %51 = math.exp %50 : vector<8x192xf32>
    %cst_26 = arith.constant 1.000000e+00 : f32
    %52 = vector.broadcast %cst_26 : f32 to vector<8x192xf32>
    %53 = arith.addf %52, %51 : vector<8x192xf32>
    %cst_27 = arith.constant 1.000000e+00 : f32
    %54 = vector.broadcast %cst_27 : f32 to vector<8x192xf32>
    %55 = arith.divf %54, %53 : vector<8x192xf32>
    %56 = arith.mulf %46, %55 : vector<8x192xf32>
    %57 = vector.extract_strided_slice %56 {offsets = [0, 0], sizes = [8, 64], strides = [1, 1]} : vector<8x192xf32> to vector<8x64xf32>
    %58 = vector.extract_strided_slice %56 {offsets = [0, 64], sizes = [8, 64], strides = [1, 1]} : vector<8x192xf32> to vector<8x64xf32>
    %59 = vector.extract_strided_slice %56 {offsets = [0, 128], sizes = [8, 64], strides = [1, 1]} : vector<8x192xf32> to vector<8x64xf32>
    %60 = arith.truncf %58 : vector<8x64xf32> to vector<8x64xbf16>
    %61 = arith.truncf %59 : vector<8x64xf32> to vector<8x64xbf16>
    %62 = arith.truncf %57 : vector<8x64xf32> to vector<8x64xbf16>
    %63 = tpu.iota {dimensions = array<i32: 0>} : vector<8x8xi32>
    %64 = tpu.iota {dimensions = array<i32: 1>} : vector<8x8xi32>
    %65 = arith.cmpi sge, %63, %64 : vector<8x8xi32>
    %cst_28 = arith.constant 1.000000e+00 : f32
    %cst_29 = arith.constant 0.000000e+00 : f32
    %66 = vector.broadcast %cst_28 : f32 to vector<8x8xf32>
    %67 = vector.broadcast %cst_29 : f32 to vector<8x8xf32>
    %68 = arith.select %65, %66, %67 : vector<8x8xi1>, vector<8x8xf32>
    %cst_30 = arith.constant 0.000000e+00 : f32
    %cst_31 = arith.constant -1.000000e+30 : f32
    %69 = vector.broadcast %cst_30 : f32 to vector<8x8xf32>
    %70 = vector.broadcast %cst_31 : f32 to vector<8x8xf32>
    %71 = arith.select %65, %69, %70 : vector<8x8xi1>, vector<8x8xf32>
    %c0_32 = arith.constant 0 : index
    %c0_33 = arith.constant 0 : index
    %72 = vector.load %arg7[%c0_32, %c0_33] : memref<1x2xf32, #tpu.memory_space<vmem>>, vector<1x2xf32>
    %73 = vector.broadcast %72 : vector<1x2xf32> to vector<8x2xf32>
    %74 = arith.mulf %23, %73 : vector<8x2xf32>
    %cst_34 = arith.constant dense<0.000000e+00> : vector<8x2xf32>
    %75 = tpu.matmul %68, %74, %cst_34 {dimension_numbers = #tpu.dot_dimension_numbers<[1], [0], [0], [1], [0, 0, 1, 1], [], []>} : vector<8x8xf32>, vector<8x2xf32>, vector<8x2xf32> -> vector<8x2xf32>
    %76 = vector.extract_strided_slice %75 {offsets = [7, 0], sizes = [1, 2], strides = [1, 1]} : vector<8x2xf32> to vector<1x2xf32>
    %c0_35 = arith.constant 0 : index
    %c0_36 = arith.constant 0 : index
    %77 = vector.load %arg13[%c0_35, %c0_36] : memref<2x64xf32, #tpu.memory_space<vmem>>, vector<2x64xf32>
    %cst_37 = arith.constant dense<0.000000e+00> : vector<8x8xf32>
    %78 = tpu.matmul %61, %60, %cst_37 {dimension_numbers = #tpu.dot_dimension_numbers<[1], [1], [0], [0], [0, 0, 1, 0], [], []>} : vector<8x64xbf16>, vector<8x64xbf16>, vector<8x8xf32> -> vector<8x8xf32>
    %c0_38 = arith.constant 0 : index
    %c0_39 = arith.constant 0 : index
    %79 = vector.load %arg15[%c0_38, %c0_39] : memref<64x64xf32, #tpu.memory_space<vmem>>, vector<64x64xf32>
    %80 = arith.truncf %79 : vector<64x64xf32> to vector<64x64xbf16>
    %cst_40 = arith.constant dense<0.000000e+00> : vector<8x64xf32>
    %81 = tpu.matmul %61, %80, %cst_40 {dimension_numbers = #tpu.dot_dimension_numbers<[1], [0], [0], [1], [0, 0, 1, 1], [], []>} : vector<8x64xbf16>, vector<64x64xbf16>, vector<8x64xf32> -> vector<8x64xf32>
    %82 = math.exp %75 : vector<8x2xf32>
    %cst_41 = arith.constant dense<0.000000e+00> : vector<8x64xf32>
    %83 = tpu.matmul %82, %77, %cst_41 {dimension_numbers = #tpu.dot_dimension_numbers<[1], [0], [0], [1], [0, 0, 1, 1], [], []>} : vector<8x2xf32>, vector<2x64xf32>, vector<8x64xf32> -> vector<8x64xf32>
    %84 = arith.mulf %83, %81 : vector<8x64xf32>
    %c0_42 = arith.constant 0 : index
    %c0_43 = arith.constant 0 : index
    %85 = vector.load %arg8[%c0_42, %c0_43] : memref<1x64xf32, #tpu.memory_space<vmem>>, vector<1x64xf32>
    %86 = vector.broadcast %85 : vector<1x64xf32> to vector<8x64xf32>
    %87 = arith.mulf %86, %57 : vector<8x64xf32>
    %88 = arith.addf %84, %87 : vector<8x64xf32>
    %89 = vector.broadcast %76 : vector<1x2xf32> to vector<8x2xf32>
    %90 = arith.subf %89, %75 : vector<8x2xf32>
    %91 = math.exp %90 : vector<8x2xf32>
    %92 = arith.mulf %91, %23 : vector<8x2xf32>
    %cst_44 = arith.constant dense<0.000000e+00> : vector<8x64xf32>
    %93 = tpu.matmul %92, %77, %cst_44 {dimension_numbers = #tpu.dot_dimension_numbers<[1], [0], [0], [1], [0, 0, 1, 1], [], []>} : vector<8x2xf32>, vector<2x64xf32>, vector<8x64xf32> -> vector<8x64xf32>
    %94 = arith.mulf %93, %57 : vector<8x64xf32>
    %95 = arith.truncf %94 : vector<8x64xf32> to vector<8x64xbf16>
    %cst_45 = arith.constant dense<0.000000e+00> : vector<64x64xf32>
    %96 = tpu.matmul %60, %95, %cst_45 {dimension_numbers = #tpu.dot_dimension_numbers<[0], [0], [1], [1], [0, 1, 1, 1], [], []>} : vector<8x64xbf16>, vector<8x64xbf16>, vector<64x64xf32> -> vector<64x64xf32>
    %97 = math.exp %76 : vector<1x2xf32>
    %cst_46 = arith.constant dense<0.000000e+00> : vector<1x64xf32>
    %98 = tpu.matmul %97, %77, %cst_46 {dimension_numbers = #tpu.dot_dimension_numbers<[1], [0], [0], [1], [0, 0, 1, 1], [], []>} : vector<1x2xf32>, vector<2x64xf32>, vector<1x64xf32> -> vector<1x64xf32>
    %c0_47 = arith.constant 0 : index
    %c0_48 = arith.constant 0 : index
    %99 = vector.load %arg15[%c0_47, %c0_48] : memref<64x64xf32, #tpu.memory_space<vmem>>, vector<64x64xf32>
    %100 = vector.broadcast %98 : vector<1x64xf32> to vector<64x64xf32>
    %101 = arith.mulf %100, %99 : vector<64x64xf32>
    %102 = arith.addf %101, %96 : vector<64x64xf32>
    %c0_49 = arith.constant 0 : index
    %c0_50 = arith.constant 0 : index
    %103 = vector.load %arg15[%c0_49, %c0_50] : memref<64x64xf32, #tpu.memory_space<vmem>>, vector<64x64xf32>
    tpu.vector_store %arg15[%c0_49, %c0_50], %102 {strides = array<i32>} : memref<64x64xf32, #tpu.memory_space<vmem>>, vector<64x64xf32>,
    %104 = math.log %23 : vector<8x2xf32>
    %105 = arith.subf %75, %104 : vector<8x2xf32>
    %106 = tpu.transpose %105, [1, 0] : vector<8x2xf32> -> vector<2x8xf32>
    %c0_51 = arith.constant 0 : index
    %c0_52 = arith.constant 0 : index
    %c0_53 = arith.constant 0 : index
    %107 = vector.load %arg17[%c0_51, %c0_52, %c0_53] : memref<1x8x2xf32, #tpu.memory_space<vmem>>, vector<1x8x2xf32>
    %108 = vector.shape_cast %107 : vector<1x8x2xf32> to vector<8x2xf32>
    %109 = vector.shape_cast %75 : vector<8x2xf32> to vector<1x8x2xf32>
    tpu.vector_store %arg17[%c0_51, %c0_52, %c0_53], %109 {strides = array<i32>} : memref<1x8x2xf32, #tpu.memory_space<vmem>>, vector<1x8x2xf32>,
    %c0_54 = arith.constant 0 : index
    %c0_55 = arith.constant 0 : index
    %c0_56 = arith.constant 0 : index
    %110 = vector.load %arg18[%c0_54, %c0_55, %c0_56] : memref<1x2x8xf32, #tpu.memory_space<vmem>>, vector<1x2x8xf32>
    %111 = vector.shape_cast %110 : vector<1x2x8xf32> to vector<2x8xf32>
    %112 = vector.shape_cast %106 : vector<2x8xf32> to vector<1x2x8xf32>
    tpu.vector_store %arg18[%c0_54, %c0_55, %c0_56], %112 {strides = array<i32>} : memref<1x2x8xf32, #tpu.memory_space<vmem>>, vector<1x2x8xf32>,
    %c0_57 = arith.constant 0 : index
    %c0_58 = arith.constant 0 : index
    %c0_59 = arith.constant 0 : index
    %113 = vector.load %arg19[%c0_57, %c0_58, %c0_59] : memref<1x8x64xbf16, #tpu.memory_space<vmem>>, vector<1x8x64xbf16>
    %114 = vector.shape_cast %113 : vector<1x8x64xbf16> to vector<8x64xbf16>
    %115 = vector.shape_cast %62 : vector<8x64xbf16> to vector<1x8x64xbf16>
    tpu.vector_store %arg19[%c0_57, %c0_58, %c0_59], %115 {strides = array<i32>} : memref<1x8x64xbf16, #tpu.memory_space<vmem>>, vector<1x8x64xbf16>,
    %c0_i32_60 = arith.constant 0 : i32
    %116 = arith.index_cast %c0_i32_60 : i32 to index
    %c0_61 = arith.constant 0 : index
    %c0_62 = arith.constant 0 : index
    %117 = vector.load %arg17[%116, %c0_61, %c0_62] : memref<1x8x2xf32, #tpu.memory_space<vmem>>, vector<1x8x2xf32>
    %118 = vector.shape_cast %117 : vector<1x8x2xf32> to vector<8x2xf32>
    %119 = arith.index_cast %c0_i32_60 : i32 to index
    %c0_63 = arith.constant 0 : index
    %c0_64 = arith.constant 0 : index
    %120 = vector.load %arg18[%119, %c0_63, %c0_64] : memref<1x2x8xf32, #tpu.memory_space<vmem>>, vector<1x2x8xf32>
    %121 = vector.shape_cast %120 : vector<1x2x8xf32> to vector<2x8xf32>
    %122 = arith.index_cast %c0_i32_60 : i32 to index
    %c0_65 = arith.constant 0 : index
    %c0_66 = arith.constant 0 : index
    %123 = vector.load %arg19[%122, %c0_65, %c0_66] : memref<1x8x64xbf16, #tpu.memory_space<vmem>>, vector<1x8x64xbf16>
    %124 = vector.shape_cast %123 : vector<1x8x64xbf16> to vector<8x64xbf16>
    %125 = vector.extract_strided_slice %118 {offsets = [0, 0], sizes = [8, 1], strides = [1, 1]} : vector<8x2xf32> to vector<8x1xf32>
    %126 = vector.extract_strided_slice %121 {offsets = [0, 0], sizes = [1, 8], strides = [1, 1]} : vector<2x8xf32> to vector<1x8xf32>
    %127 = vector.broadcast %125 : vector<8x1xf32> to vector<8x8xf32>
    %128 = vector.broadcast %126 : vector<1x8xf32> to vector<8x8xf32>
    %129 = arith.subf %127, %128 : vector<8x8xf32>
    %130 = arith.addf %129, %71 : vector<8x8xf32>
    %131 = math.exp %130 : vector<8x8xf32>
    %132 = arith.mulf %78, %131 : vector<8x8xf32>
    %133 = arith.truncf %132 : vector<8x8xf32> to vector<8x8xbf16>
    %134 = vector.extract_strided_slice %124 {offsets = [0, 0], sizes = [8, 32], strides = [1, 1]} : vector<8x64xbf16> to vector<8x32xbf16>
    %cst_67 = arith.constant dense<0.000000e+00> : vector<8x32xf32>
    %135 = tpu.matmul %133, %134, %cst_67 {dimension_numbers = #tpu.dot_dimension_numbers<[1], [0], [0], [1], [0, 0, 1, 1], [], []>} : vector<8x8xbf16>, vector<8x32xbf16>, vector<8x32xf32> -> vector<8x32xf32>
    %136 = vector.extract_strided_slice %118 {offsets = [0, 1], sizes = [8, 1], strides = [1, 1]} : vector<8x2xf32> to vector<8x1xf32>
    %137 = vector.extract_strided_slice %121 {offsets = [1, 0], sizes = [1, 8], strides = [1, 1]} : vector<2x8xf32> to vector<1x8xf32>
    %138 = vector.broadcast %136 : vector<8x1xf32> to vector<8x8xf32>
    %139 = vector.broadcast %137 : vector<1x8xf32> to vector<8x8xf32>
    %140 = arith.subf %138, %139 : vector<8x8xf32>
    %141 = arith.addf %140, %71 : vector<8x8xf32>
    %142 = math.exp %141 : vector<8x8xf32>
    %143 = arith.mulf %78, %142 : vector<8x8xf32>
    %144 = arith.truncf %143 : vector<8x8xf32> to vector<8x8xbf16>
    %145 = vector.extract_strided_slice %124 {offsets = [0, 32], sizes = [8, 32], strides = [1, 1]} : vector<8x64xbf16> to vector<8x32xbf16>
    %cst_68 = arith.constant dense<0.000000e+00> : vector<8x32xf32>
    %146 = tpu.matmul %144, %145, %cst_68 {dimension_numbers = #tpu.dot_dimension_numbers<[1], [0], [0], [1], [0, 0, 1, 1], [], []>} : vector<8x8xbf16>, vector<8x32xbf16>, vector<8x32xf32> -> vector<8x32xf32>
    %147 = tpu.concatenate %135, %146 in 1 : vector<8x32xf32>, vector<8x32xf32> -> vector<8x64xf32>
    %148 = arith.index_cast %c0_i32_60 : i32 to index
    %c0_69 = arith.constant 0 : index
    %c0_70 = arith.constant 0 : index
    %149 = vector.load %arg20[%148, %c0_69, %c0_70] : memref<1x8x64xf32, #tpu.memory_space<vmem>>, vector<1x8x64xf32>
    %150 = vector.shape_cast %149 : vector<1x8x64xf32> to vector<8x64xf32>
    %151 = vector.shape_cast %147 : vector<8x64xf32> to vector<1x8x64xf32>
    tpu.vector_store %arg20[%148, %c0_69, %c0_70], %151 {strides = array<i32>} : memref<1x8x64xf32, #tpu.memory_space<vmem>>, vector<1x8x64xf32>,
    %c1_i32 = arith.constant 1 : i32
    %c0_71 = arith.constant 0 : index
    %c0_72 = arith.constant 0 : index
    %c0_73 = arith.constant 0 : index
    %152 = vector.load %arg20[%c0_71, %c0_72, %c0_73] : memref<1x8x64xf32, #tpu.memory_space<vmem>>, vector<1x8x64xf32>
    %153 = vector.shape_cast %152 : vector<1x8x64xf32> to vector<8x64xf32>
    %154 = arith.addf %153, %88 : vector<8x64xf32>
    %cst_74 = arith.constant 0.000000e+00 : f32
    %155 = vector.broadcast %cst_74 : f32 to vector<8x64xf32>
    %156 = arith.subf %155, %8 : vector<8x64xf32>
    %157 = math.exp %156 : vector<8x64xf32>
    %cst_75 = arith.constant 1.000000e+00 : f32
    %158 = vector.broadcast %cst_75 : f32 to vector<8x64xf32>
    %159 = arith.addf %158, %157 : vector<8x64xf32>
    %cst_76 = arith.constant 1.000000e+00 : f32
    %160 = vector.broadcast %cst_76 : f32 to vector<8x64xf32>
    %161 = arith.divf %160, %159 : vector<8x64xf32>
    %162 = arith.mulf %8, %161 : vector<8x64xf32>
    %163 = arith.mulf %154, %162 : vector<8x64xf32>
    %164 = arith.mulf %163, %163 : vector<8x64xf32>
    %cst_77 = arith.constant dense<0.000000e+00> : vector<8xf32>
    %165 = vector.multi_reduction <add>, %164, %cst_77 [1] : vector<8x64xf32> to vector<8xf32>
    %166 = vector.shape_cast %165 : vector<8xf32> to vector<8x1xf32>
    %cst_78 = arith.constant 6.400000e+01 : f32
    %167 = vector.broadcast %cst_78 : f32 to vector<8x1xf32>
    %168 = arith.divf %166, %167 : vector<8x1xf32>
    %cst_79 = arith.constant 9.99999974E-6 : f32
    %169 = vector.broadcast %cst_79 : f32 to vector<8x1xf32>
    %170 = arith.addf %168, %169 : vector<8x1xf32>
    %171 = math.rsqrt %170 : vector<8x1xf32>
    %172 = vector.broadcast %171 : vector<8x1xf32> to vector<8x64xf32>
    %173 = arith.mulf %163, %172 : vector<8x64xf32>
    %c0_80 = arith.constant 0 : index
    %c0_81 = arith.constant 0 : index
    %174 = vector.load %arg9[%c0_80, %c0_81] : memref<1x64xf32, #tpu.memory_space<vmem>>, vector<1x64xf32>
    %175 = vector.broadcast %174 : vector<1x64xf32> to vector<8x64xf32>
    %176 = arith.mulf %173, %175 : vector<8x64xf32>
    %177 = arith.truncf %176 : vector<8x64xf32> to vector<8x64xbf16>
    %c0_82 = arith.constant 0 : index
    %c0_83 = arith.constant 0 : index
    %178 = vector.load %arg10[%c0_82, %c0_83] : memref<64x32xbf16, #tpu.memory_space<vmem>>, vector<64x32xbf16>
    %cst_84 = arith.constant dense<0.000000e+00> : vector<8x32xf32>
    %179 = tpu.matmul %177, %178, %cst_84 {dimension_numbers = #tpu.dot_dimension_numbers<[1], [0], [0], [1], [0, 0, 1, 1], [], []>} : vector<8x64xbf16>, vector<64x32xbf16>, vector<8x32xf32> -> vector<8x32xf32>
    %180 = arith.addf %179, %4 : vector<8x32xf32>
    %cst_85 = arith.constant dense<0.000000e+00> : vector<8xf32>
    %181 = vector.multi_reduction <add>, %180, %cst_85 [1] : vector<8x32xf32> to vector<8xf32>
    %182 = vector.shape_cast %181 : vector<8xf32> to vector<8x1xf32>
    %cst_86 = arith.constant 3.200000e+01 : f32
    %183 = vector.broadcast %cst_86 : f32 to vector<8x1xf32>
    %184 = arith.divf %182, %183 : vector<8x1xf32>
    %185 = vector.broadcast %184 : vector<8x1xf32> to vector<8x32xf32>
    %186 = arith.subf %180, %185 : vector<8x32xf32>
    %187 = vector.broadcast %184 : vector<8x1xf32> to vector<8x32xf32>
    %188 = arith.subf %180, %187 : vector<8x32xf32>
    %189 = arith.mulf %186, %188 : vector<8x32xf32>
    %cst_87 = arith.constant dense<0.000000e+00> : vector<8xf32>
    %190 = vector.multi_reduction <add>, %189, %cst_87 [1] : vector<8x32xf32> to vector<8xf32>
    %191 = vector.shape_cast %190 : vector<8xf32> to vector<8x1xf32>
    %cst_88 = arith.constant 3.200000e+01 : f32
    %192 = vector.broadcast %cst_88 : f32 to vector<8x1xf32>
    %193 = arith.divf %191, %192 : vector<8x1xf32>
    %194 = vector.broadcast %184 : vector<8x1xf32> to vector<8x32xf32>
    %195 = arith.subf %180, %194 : vector<8x32xf32>
    %cst_89 = arith.constant 9.99999974E-6 : f32
    %196 = vector.broadcast %cst_89 : f32 to vector<8x1xf32>
    %197 = arith.addf %193, %196 : vector<8x1xf32>
    %198 = math.rsqrt %197 : vector<8x1xf32>
    %199 = vector.broadcast %198 : vector<8x1xf32> to vector<8x32xf32>
    %200 = arith.mulf %195, %199 : vector<8x32xf32>
    %c0_90 = arith.constant 0 : index
    %c0_91 = arith.constant 0 : index
    %201 = vector.load %arg11[%c0_90, %c0_91] : memref<1x32xf32, #tpu.memory_space<vmem>>, vector<1x32xf32>
    %202 = vector.broadcast %201 : vector<1x32xf32> to vector<8x32xf32>
    %203 = arith.mulf %200, %202 : vector<8x32xf32>
    %c0_92 = arith.constant 0 : index
    %c0_93 = arith.constant 0 : index
    %204 = vector.load %arg12[%c0_92, %c0_93] : memref<1x32xf32, #tpu.memory_space<vmem>>, vector<1x32xf32>
    %205 = vector.broadcast %204 : vector<1x32xf32> to vector<8x32xf32>
    %206 = arith.addf %203, %205 : vector<8x32xf32>
    %c0_94 = arith.constant 0 : index
    %c0_95 = arith.constant 0 : index
    %c0_96 = arith.constant 0 : index
    %207 = vector.load %arg14[%c0_94, %c0_95, %c0_96] : memref<1x8x32xf32, #tpu.memory_space<vmem>>, vector<1x8x32xf32>
    %208 = vector.shape_cast %207 : vector<1x8x32xf32> to vector<8x32xf32>
    %209 = vector.shape_cast %206 : vector<8x32xf32> to vector<1x8x32xf32>
    tpu.vector_store %arg14[%c0_94, %c0_95, %c0_96], %209 {strides = array<i32>} : memref<1x8x32xf32, #tpu.memory_space<vmem>>, vector<1x8x32xf32>,
    return
  }
  func.func @transform_0(%arg0: i32, %arg1: i32) -> (i32, i32, i32) {
    %c0_i32 = arith.constant 0 : i32
    %c0_i32_0 = arith.constant 0 : i32
    return %arg0, %arg1, %c0_i32 : i32, i32, i32
  }
  func.func @transform_1(%arg0: i32, %arg1: i32) -> (i32, i32) {
    %c0_i32 = arith.constant 0 : i32
    %c0_i32_0 = arith.constant 0 : i32
    %c0_i32_1 = arith.constant 0 : i32
    return %c0_i32, %c0_i32_0 : i32, i32
  }
  func.func @transform_2(%arg0: i32, %arg1: i32) -> (i32, i32) {
    %c0_i32 = arith.constant 0 : i32
    %c0_i32_0 = arith.constant 0 : i32
    %c0_i32_1 = arith.constant 0 : i32
    return %c0_i32, %c0_i32_0 : i32, i32
  }
  func.func @transform_3(%arg0: i32, %arg1: i32) -> (i32, i32) {
    %c0_i32 = arith.constant 0 : i32
    %c0_i32_0 = arith.constant 0 : i32
    %c0_i32_1 = arith.constant 0 : i32
    return %c0_i32, %c0_i32_0 : i32, i32
  }
  func.func @transform_4(%arg0: i32, %arg1: i32) -> (i32, i32) {
    %c0_i32 = arith.constant 0 : i32
    %c0_i32_0 = arith.constant 0 : i32
    %c0_i32_1 = arith.constant 0 : i32
    return %c0_i32, %c0_i32_0 : i32, i32
  }
  func.func @transform_5(%arg0: i32, %arg1: i32) -> (i32, i32) {
    %c0_i32 = arith.constant 0 : i32
    %c0_i32_0 = arith.constant 0 : i32
    %c0_i32_1 = arith.constant 0 : i32
    return %c0_i32, %c0_i32_0 : i32, i32
  }
  func.func @transform_6(%arg0: i32, %arg1: i32) -> (i32, i32) {
    %c0_i32 = arith.constant 0 : i32
    %c0_i32_0 = arith.constant 0 : i32
    %c0_i32_1 = arith.constant 0 : i32
    return %c0_i32, %c0_i32_0 : i32, i32
  }
  func.func @transform_7(%arg0: i32, %arg1: i32) -> (i32, i32) {
    %c0_i32 = arith.constant 0 : i32
    %c0_i32_0 = arith.constant 0 : i32
    %c0_i32_1 = arith.constant 0 : i32
    return %c0_i32, %c0_i32_0 : i32, i32
  }
  func.func @transform_8(%arg0: i32, %arg1: i32) -> (i32, i32) {
    %c0_i32 = arith.constant 0 : i32
    %c0_i32_0 = arith.constant 0 : i32
    %c0_i32_1 = arith.constant 0 : i32
    return %c0_i32, %c0_i32_0 : i32, i32
  }
  func.func @transform_9(%arg0: i32, %arg1: i32) -> (i32, i32) {
    %c0_i32 = arith.constant 0 : i32
    %c0_i32_0 = arith.constant 0 : i32
    %c0_i32_1 = arith.constant 0 : i32
    return %c0_i32, %c0_i32_0 : i32, i32
  }
  func.func @transform_10(%arg0: i32, %arg1: i32) -> (i32, i32) {
    %c0_i32 = arith.constant 0 : i32
    %c0_i32_0 = arith.constant 0 : i32
    %c0_i32_1 = arith.constant 0 : i32
    return %c0_i32, %c0_i32_0 : i32, i32
  }
  func.func @transform_11(%arg0: i32, %arg1: i32) -> (i32, i32) {
    %c0_i32 = arith.constant 0 : i32
    %c0_i32_0 = arith.constant 0 : i32
    %c0_i32_1 = arith.constant 0 : i32
    return %c0_i32, %c0_i32_0 : i32, i32
  }
  func.func @transform_12(%arg0: i32, %arg1: i32) -> (i32, i32, i32) {
    %c0_i32 = arith.constant 0 : i32
    %c0_i32_0 = arith.constant 0 : i32
    return %arg0, %arg1, %c0_i32 : i32, i32, i32
  }
}

</mosaic_0001>

<llo_original>
// kernel: tpu_custom_call.1
$region0: #{tpu_custom_call.1}
  #allocation0 [shape = 'u32[]', space=smem, size = 0x4, offset = 0x4, fixed_abs, tag = 'smem constant byte address 0x4 - core index']
  #allocation1 [shape = 'u32[144,128]{1,0:T(1,128)}', space=vmem, size = 0x12000, scoped, tag = 'internal scratch']
  #allocation2 [shape = 'f32[64,64]{1,0:T(8,128)}', space=vmem, size = 0x8000, scoped, tag = 'scratch operand']
  #allocation3 [shape = 'f32[16,192]{1,0:T(8,128)}', space=vmem, size = 0x4000, scoped, tag = 'scratch operand']
  #allocation4 [shape = 'f32[1,8,2]{2,1,0:T(8,128)}', space=vmem, size = 0x1000, scoped, tag = 'scratch operand']
  #allocation5 [shape = 'f32[1,2,8]{2,1,0:T(2,128)}', space=vmem, size = 0x400, scoped, tag = 'scratch operand']
  #allocation6 [shape = 'bf16[1,8,64]{2,1,0:T(8,128)(2,1)}', space=vmem, size = 0x800, scoped, tag = 'scratch operand']
  #allocation7 [shape = 'f32[1,8,64]{2,1,0:T(8,128)}', space=vmem, size = 0x1000, scoped, tag = 'scratch operand']
  %s0 = inlined_call_operand.hbm [shape: f32[2,16,32], index: 0, kind: input, shape index: {}]
  %s1 = inlined_call_operand.vmem [shape: bf16[32,258], index: 1, kind: input, shape index: {}]
  %s2 = inlined_call_operand.hbm [shape: f32[4,192], index: 2, kind: input, shape index: {}]
  %s3 = inlined_call_operand.vmem [shape: f32[1,192], index: 3, kind: input, shape index: {}]
  %s4 = inlined_call_operand.vmem [shape: f32[1,2], index: 4, kind: input, shape index: {}]
  %s5 = inlined_call_operand.vmem [shape: f32[1,2], index: 5, kind: input, shape index: {}]
  %s6 = inlined_call_operand.vmem [shape: f32[1,64], index: 6, kind: input, shape index: {}]
  %s7 = inlined_call_operand.vmem [shape: f32[1,64], index: 7, kind: input, shape index: {}]
  %s8 = inlined_call_operand.vmem [shape: bf16[64,32], index: 8, kind: input, shape index: {}]
  %s9 = inlined_call_operand.vmem [shape: f32[1,32], index: 9, kind: input, shape index: {}]
  %s10 = inlined_call_operand.vmem [shape: f32[1,32], index: 10, kind: input, shape index: {}]
  %s11 = inlined_call_operand.vmem [shape: f32[2,64], index: 11, kind: input, shape index: {}]
  %s12 = inlined_call_operand.hbm [shape: f32[2,16,32], index: 12, kind: output, shape index: {}]
  %s13 = sld [smem:[#allocation0]]
  $region93: #{tpu_custom_call.1} parent=0
    _
  %s15 = ssub.s32 1, %s13
  %s16 = scalar_select 0, %s15, %s13
  $region1: #{tpu_custom_call.1} parent=0
    #allocation8 [shape = 'u8[8192]{0}', space=vmem, size = 0x2000, scoped, tag = 'input window, operand 0']
    #allocation9 [shape = 's32[2]{0}', space=sflag, size = 0x8, scoped, tag = 'scoped memory for tpu_custom_call.1']
    #allocation10 [shape = 's32[2]{0}', space=sflag, size = 0x8, scoped, tag = 'scoped memory for tpu_custom_call.1']
    #allocation11 [shape = 'u8[4096]{0}', space=vmem, size = 0x1000, scoped, tag = 'input window, operand 2, single buffered']
    #allocation12 [shape = 's32[1]{0}', space=sflag, size = 0x4, scoped, tag = 'scoped memory for tpu_custom_call.1']
    #allocation13 [shape = 'u8[8192]{0}', space=vmem, size = 0x2000, scoped, tag = 'output window, operand 0']
    %17 = vsyncpa [#allocation9], 0
    %s18 = scalar_lea.sflag [#allocation9], 1
    %19 = vsyncpa %s18, 0
    %20 = vsyncpa [#allocation12], 0
    %21 = vsyncpa [#allocation10], 0
    %s22 = scalar_lea.sflag [#allocation10], 1
    %23 = vsyncpa %s22, 0
    loop: start=0, step=1, limit=6
    $region2: #{tpu_custom_call.1} parent=1 // loop_pre_header
      _
    $region3: #{tpu_custom_call.1} parent=1 // loop_header
      %s25 = sphi 0, %s29
      %p26 = scmp.ge.s32.totalorder %s25, 6
      %s32 = sphi 0, %s44
      %s33 = sphi 0, %s40
      %s34 = sphi 0, %s32
      %s35 = sphi 0, %s33
      %s36 = sphi 0, %s34
      %s37 = sphi 0, %s35
      %s49 = sphi 0, %s51
      %s52 = sphi 0, %s49
      %s53 = sphi 0, %s52
      %s69 = sphi 0, %s53
      %s73 = sphi 0, %s73
      %s75 = sphi 0, %s73
      %s76 = sphi 0, %s75
      %s90 = sphi 0, %s76
      %s94 = sphi 0, %s94
      %s96 = sphi 0, %s94
      %s97 = sphi 0, %s96
      %s111 = sphi 0, %s97
      %s115 = sphi 0, %s115
      %s117 = sphi 0, %s115
      %s118 = sphi 0, %s117
      %s132 = sphi 0, %s118
      %s136 = sphi 0, %s136
      %s138 = sphi 0, %s136
      %s139 = sphi 0, %s138
      %s153 = sphi 0, %s139
      %s157 = sphi 0, %s157
      %s159 = sphi 0, %s157
      %s160 = sphi 0, %s159
      %s174 = sphi 0, %s160
      %s178 = sphi 0, %s178
      %s180 = sphi 0, %s178
      %s181 = sphi 0, %s180
      %s195 = sphi 0, %s181
      %s199 = sphi 0, %s199
      %s201 = sphi 0, %s199
      %s202 = sphi 0, %s201
      %s216 = sphi 0, %s202
      %s220 = sphi 0, %s220
      %s222 = sphi 0, %s220
      %s223 = sphi 0, %s222
      %s237 = sphi 0, %s223
      %s241 = sphi 0, %s241
      %s243 = sphi 0, %s241
      %s244 = sphi 0, %s243
      %s258 = sphi 0, %s244
      %s262 = sphi 0, %s262
      %s264 = sphi 0, %s262
      %s265 = sphi 0, %s264
      %s279 = sphi 0, %s265
      %s283 = sphi 0, %s283
      %s285 = sphi 0, %s283
      %s286 = sphi 0, %s285
      %s300 = sphi 0, %s286
      %s308 = sphi 0, %s310
      %s311 = sphi 0, %s308
      %s312 = sphi 0, %s311
      %s328 = sphi 0, %s312
    $region4: #{tpu_custom_call.1} parent=1 // loop_header_branch
      %28 = sbr.rel (%p26) target = $region8
    $region5: #{tpu_custom_call.1} parent=1 // loop_body
      %s30 = ssub.s32 %s25, 1
      %s31 = ssub.s32 %s25, 2
      %s38 = sadd.s32 1, %s33
      %p39 = scmp.ge.s32.totalorder %s38, 2
      %s40 = scalar_select %p39, 0, %s38
      %s41 = sadd.s32 1, %s32
      %s42 = scalar_select %p39, %s41, %s32
      %p43 = scmp.ge.s32.totalorder %s42, 2
      %s44 = scalar_select %p43, 0, %s42
      %s45 = ssub.s32 %s32, %s44
      %s46 = ssub.s32 %s33, %s40
      %s47 = sor.u32 %s45, %s46
      %p48 = scmp.eq.s32.totalorder %s47, 0
      %s50 = sadd.s32 %s49, 1
      %s51 = scalar_select %p48, %s49, %s50
      %p54 = pneg %p48
      %p55 = scmp.eq.s32.totalorder %s25, 3
      %p56 = por %p54, %p55
      %p57 = scmp.ne.s32.totalorder %s49, %s52
      %p58 = scmp.eq.s32.totalorder %s25, 0
      %p59 = por %p57, %p58
      %p60 = scmp.ne.s32.totalorder %s49, %s52
      %p61 = scmp.eq.s32.totalorder %s30, 3
      %p62 = por %p60, %p61
      %p63 = scmp.ne.s32.totalorder %s52, %s53
      %p64 = scmp.eq.s32.totalorder %s30, 0
      %p65 = por %p63, %p64
      %p66 = scmp.ne.s32.totalorder %s52, %s53
      %p67 = scmp.eq.s32.totalorder %s31, 3
      %p68 = por %p66, %p67
      %p70 = scmp.ne.s32.totalorder %s53, %s69
      %p71 = scmp.eq.s32.totalorder %s31, 0
      %p72 = por %p70, %p71
      %s74 = sadd.s32 %s73, 1
      %p77 = scmp.eq.s32.totalorder %s25, 3
      %p78 = scmp.ne.s32.totalorder %s73, %s75
      %p79 = scmp.eq.s32.totalorder %s25, 0
      %p80 = por %p78, %p79
      %p81 = scmp.ne.s32.totalorder %s73, %s75
      %p82 = scmp.eq.s32.totalorder %s30, 3
      %p83 = por %p81, %p82
      %p84 = scmp.ne.s32.totalorder %s75, %s76
      %p85 = scmp.eq.s32.totalorder %s30, 0
      %p86 = por %p84, %p85
      %p87 = scmp.ne.s32.totalorder %s75, %s76
      %p88 = scmp.eq.s32.totalorder %s31, 3
      %p89 = por %p87, %p88
      %p91 = scmp.ne.s32.totalorder %s76, %s90
      %p92 = scmp.eq.s32.totalorder %s31, 0
      %p93 = por %p91, %p92
      %s95 = sadd.s32 %s94, 1
      %p98 = scmp.eq.s32.totalorder %s25, 3
      %p99 = scmp.ne.s32.totalorder %s94, %s96
      %p100 = scmp.eq.s32.totalorder %s25, 0
      %p101 = por %p99, %p100
      %p102 = scmp.ne.s32.totalorder %s94, %s96
      %p103 = scmp.eq.s32.totalorder %s30, 3
      %p104 = por %p102, %p103
      %p105 = scmp.ne.s32.totalorder %s96, %s97
      %p106 = scmp.eq.s32.totalorder %s30, 0
      %p107 = por %p105, %p106
      %p108 = scmp.ne.s32.totalorder %s96, %s97
      %p109 = scmp.eq.s32.totalorder %s31, 3
      %p110 = por %p108, %p109
      %p112 = scmp.ne.s32.totalorder %s97, %s111
      %p113 = scmp.eq.s32.totalorder %s31, 0
      %p114 = por %p112, %p113
      %s116 = sadd.s32 %s115, 1
      %p119 = scmp.eq.s32.totalorder %s25, 3
      %p120 = scmp.ne.s32.totalorder %s115, %s117
      %p121 = scmp.eq.s32.totalorder %s25, 0
      %p122 = por %p120, %p121
      %p123 = scmp.ne.s32.totalorder %s115, %s117
      %p124 = scmp.eq.s32.totalorder %s30, 3
      %p125 = por %p123, %p124
      %p126 = scmp.ne.s32.totalorder %s117, %s118
      %p127 = scmp.eq.s32.totalorder %s30, 0
      %p128 = por %p126, %p127
      %p129 = scmp.ne.s32.totalorder %s117, %s118
      %p130 = scmp.eq.s32.totalorder %s31, 3
      %p131 = por %p129, %p130
      %p133 = scmp.ne.s32.totalorder %s118, %s132
      %p134 = scmp.eq.s32.totalorder %s31, 0
      %p135 = por %p133, %p134
      %s137 = sadd.s32 %s136, 1
      %p140 = scmp.eq.s32.totalorder %s25, 3
      %p141 = scmp.ne.s32.totalorder %s136, %s138
      %p142 = scmp.eq.s32.totalorder %s25, 0
      %p143 = por %p141, %p142
      %p144 = scmp.ne.s32.totalorder %s136, %s138
      %p145 = scmp.eq.s32.totalorder %s30, 3
      %p146 = por %p144, %p145
      %p147 = scmp.ne.s32.totalorder %s138, %s139
      %p148 = scmp.eq.s32.totalorder %s30, 0
      %p149 = por %p147, %p148
      %p150 = scmp.ne.s32.totalorder %s138, %s139
      %p151 = scmp.eq.s32.totalorder %s31, 3
      %p152 = por %p150, %p151
      %p154 = scmp.ne.s32.totalorder %s139, %s153
      %p155 = scmp.eq.s32.totalorder %s31, 0
      %p156 = por %p154, %p155
      %s158 = sadd.s32 %s157, 1
      %p161 = scmp.eq.s32.totalorder %s25, 3
      %p162 = scmp.ne.s32.totalorder %s157, %s159
      %p163 = scmp.eq.s32.totalorder %s25, 0
      %p164 = por %p162, %p163
      %p165 = scmp.ne.s32.totalorder %s157, %s159
      %p166 = scmp.eq.s32.totalorder %s30, 3
      %p167 = por %p165, %p166
      %p168 = scmp.ne.s32.totalorder %s159, %s160
      %p169 = scmp.eq.s32.totalorder %s30, 0
      %p170 = por %p168, %p169
      %p171 = scmp.ne.s32.totalorder %s159, %s160
      %p172 = scmp.eq.s32.totalorder %s31, 3
      %p173 = por %p171, %p172
      %p175 = scmp.ne.s32.totalorder %s160, %s174
      %p176 = scmp.eq.s32.totalorder %s31, 0
      %p177 = por %p175, %p176
      %s179 = sadd.s32 %s178, 1
      %p182 = scmp.eq.s32.totalorder %s25, 3
      %p183 = scmp.ne.s32.totalorder %s178, %s180
      %p184 = scmp.eq.s32.totalorder %s25, 0
      %p185 = por %p183, %p184
      %p186 = scmp.ne.s32.totalorder %s178, %s180
      %p187 = scmp.eq.s32.totalorder %s30, 3
      %p188 = por %p186, %p187
      %p189 = scmp.ne.s32.totalorder %s180, %s181
      %p190 = scmp.eq.s32.totalorder %s30, 0
      %p191 = por %p189, %p190
      %p192 = scmp.ne.s32.totalorder %s180, %s181
      %p193 = scmp.eq.s32.totalorder %s31, 3
      %p194 = por %p192, %p193
      %p196 = scmp.ne.s32.totalorder %s181, %s195
      %p197 = scmp.eq.s32.totalorder %s31, 0
      %p198 = por %p196, %p197
      %s200 = sadd.s32 %s199, 1
      %p203 = scmp.eq.s32.totalorder %s25, 3
      %p204 = scmp.ne.s32.totalorder %s199, %s201
      %p205 = scmp.eq.s32.totalorder %s25, 0
      %p206 = por %p204, %p205
      %p207 = scmp.ne.s32.totalorder %s199, %s201
      %p208 = scmp.eq.s32.totalorder %s30, 3
      %p209 = por %p207, %p208
      %p210 = scmp.ne.s32.totalorder %s201, %s202
      %p211 = scmp.eq.s32.totalorder %s30, 0
      %p212 = por %p210, %p211
      %p213 = scmp.ne.s32.totalorder %s201, %s202
      %p214 = scmp.eq.s32.totalorder %s31, 3
      %p215 = por %p213, %p214
      %p217 = scmp.ne.s32.totalorder %s202, %s216
      %p218 = scmp.eq.s32.totalorder %s31, 0
      %p219 = por %p217, %p218
      %s221 = sadd.s32 %s220, 1
      %p224 = scmp.eq.s32.totalorder %s25, 3
      %p225 = scmp.ne.s32.totalorder %s220, %s222
      %p226 = scmp.eq.s32.totalorder %s25, 0
      %p227 = por %p225, %p226
      %p228 = scmp.ne.s32.totalorder %s220, %s222
      %p229 = scmp.eq.s32.totalorder %s30, 3
      %p230 = por %p228, %p229
      %p231 = scmp.ne.s32.totalorder %s222, %s223
      %p232 = scmp.eq.s32.totalorder %s30, 0
      %p233 = por %p231, %p232
      %p234 = scmp.ne.s32.totalorder %s222, %s223
      %p235 = scmp.eq.s32.totalorder %s31, 3
      %p236 = por %p234, %p235
      %p238 = scmp.ne.s32.totalorder %s223, %s237
      %p239 = scmp.eq.s32.totalorder %s31, 0
      %p240 = por %p238, %p239
      %s242 = sadd.s32 %s241, 1
      %p245 = scmp.eq.s32.totalorder %s25, 3
      %p246 = scmp.ne.s32.totalorder %s241, %s243
      %p247 = scmp.eq.s32.totalorder %s25, 0
      %p248 = por %p246, %p247
      %p249 = scmp.ne.s32.totalorder %s241, %s243
      %p250 = scmp.eq.s32.totalorder %s30, 3
      %p251 = por %p249, %p250
      %p252 = scmp.ne.s32.totalorder %s243, %s244
      %p253 = scmp.eq.s32.totalorder %s30, 0
      %p254 = por %p252, %p253
      %p255 = scmp.ne.s32.totalorder %s243, %s244
      %p256 = scmp.eq.s32.totalorder %s31, 3
      %p257 = por %p255, %p256
      %p259 = scmp.ne.s32.totalorder %s244, %s258
      %p260 = scmp.eq.s32.totalorder %s31, 0
      %p261 = por %p259, %p260
      %s263 = sadd.s32 %s262, 1
      %p266 = scmp.eq.s32.totalorder %s25, 3
      %p267 = scmp.ne.s32.totalorder %s262, %s264
      %p268 = scmp.eq.s32.totalorder %s25, 0
      %p269 = por %p267, %p268
      %p270 = scmp.ne.s32.totalorder %s262, %s264
      %p271 = scmp.eq.s32.totalorder %s30, 3
      %p272 = por %p270, %p271
      %p273 = scmp.ne.s32.totalorder %s264, %s265
      %p274 = scmp.eq.s32.totalorder %s30, 0
      %p275 = por %p273, %p274
      %p276 = scmp.ne.s32.totalorder %s264, %s265
      %p277 = scmp.eq.s32.totalorder %s31, 3
      %p278 = por %p276, %p277
      %p280 = scmp.ne.s32.totalorder %s265, %s279
      %p281 = scmp.eq.s32.totalorder %s31, 0
      %p282 = por %p280, %p281
      %s284 = sadd.s32 %s283, 1
      %p287 = scmp.eq.s32.totalorder %s25, 3
      %p288 = scmp.ne.s32.totalorder %s283, %s285
      %p289 = scmp.eq.s32.totalorder %s25, 0
      %p290 = por %p288, %p289
      %p291 = scmp.ne.s32.totalorder %s283, %s285
      %p292 = scmp.eq.s32.totalorder %s30, 3
      %p293 = por %p291, %p292
      %p294 = scmp.ne.s32.totalorder %s285, %s286
      %p295 = scmp.eq.s32.totalorder %s30, 0
      %p296 = por %p294, %p295
      %p297 = scmp.ne.s32.totalorder %s285, %s286
      %p298 = scmp.eq.s32.totalorder %s31, 3
      %p299 = por %p297, %p298
      %p301 = scmp.ne.s32.totalorder %s286, %s300
      %p302 = scmp.eq.s32.totalorder %s31, 0
      %p303 = por %p301, %p302
      %s304 = ssub.s32 %s32, %s44
      %s305 = ssub.s32 %s33, %s40
      %s306 = sor.u32 %s304, %s305
      %p307 = scmp.eq.s32.totalorder %s306, 0
      %s309 = sadd.s32 %s308, 1
      %s310 = scalar_select %p307, %s308, %s309
      %p313 = pneg %p307
      %p314 = scmp.eq.s32.totalorder %s25, 3
      %p315 = por %p313, %p314
      %p316 = scmp.ne.s32.totalorder %s308, %s311
      %p317 = scmp.eq.s32.totalorder %s25, 0
      %p318 = por %p316, %p317
      %p319 = scmp.ne.s32.totalorder %s308, %s311
      %p320 = scmp.eq.s32.totalorder %s30, 3
      %p321 = por %p319, %p320
      %p322 = scmp.ne.s32.totalorder %s311, %s312
      %p323 = scmp.eq.s32.totalorder %s30, 0
      %p324 = por %p322, %p323
      %p325 = scmp.ne.s32.totalorder %s311, %s312
      %p326 = scmp.eq.s32.totalorder %s31, 3
      %p327 = por %p325, %p326
      %p329 = scmp.ne.s32.totalorder %s312, %s328
      %p330 = scmp.eq.s32.totalorder %s31, 0
      %p331 = por %p329, %p330
      %p332 = scmp.le.s32.totalorder 1, %s25
      %p333 = scmp.lt.s32.totalorder %s25, 5
      %p334 = pnand %p332, %p333
      %p335 = pneg %p334
      // Predicated region
      $region9: #{tpu_custom_call.1} parent=5 // pred_check
        _
      $region10: #{tpu_custom_call.1} parent=5 // pred_check_branch
        %337 = sbr.rel (%p334) target = $region12
      $region11: #{tpu_custom_call.1} parent=5 // pred_region
        %s338 = ssub.s32 %s25, 1
        // Predicated region
        $region13: #{tpu_custom_call.1} parent=11 // pred_check
          %p339 = pneg %p86
        $region14: #{tpu_custom_call.1} parent=11 // pred_check_branch
          %341 = sbr.rel (%p339) target = $region16
        $region15: #{tpu_custom_call.1} parent=11 // pred_region
          _
        $region16: #{tpu_custom_call.1} parent=11 // pred_fallthru
          _
        // Predicated region
        $region17: #{tpu_custom_call.1} parent=11 // pred_check
          %p342 = pneg %p107
        $region18: #{tpu_custom_call.1} parent=11 // pred_check_branch
          %344 = sbr.rel (%p342) target = $region20
        $region19: #{tpu_custom_call.1} parent=11 // pred_region
          %s346 = ssub.s32 128, 128
          %347 = vsyncadd [#allocation12], %s346
          %s349 = sshll.u32 [#allocation11], 4
          %s350 = int_to_ptr.vmem [resolvable:$true] %s349
          %352 = dma.hbm_to_vmem [thread:$0]  %s2, 128, %s350, [#allocation12]
        $region20: #{tpu_custom_call.1} parent=11 // pred_fallthru
          _
        // Predicated region
        $region21: #{tpu_custom_call.1} parent=11 // pred_check
          %p353 = pneg %p128
        $region22: #{tpu_custom_call.1} parent=11 // pred_check_branch
          %355 = sbr.rel (%p353) target = $region24
        $region23: #{tpu_custom_call.1} parent=11 // pred_region
          _
        $region24: #{tpu_custom_call.1} parent=11 // pred_fallthru
          _
        // Predicated region
        $region25: #{tpu_custom_call.1} parent=11 // pred_check
          %p356 = pneg %p149
        $region26: #{tpu_custom_call.1} parent=11 // pred_check_branch
          %358 = sbr.rel (%p356) target = $region28
        $region27: #{tpu_custom_call.1} parent=11 // pred_region
          _
        $region28: #{tpu_custom_call.1} parent=11 // pred_fallthru
          _
        // Predicated region
        $region29: #{tpu_custom_call.1} parent=11 // pred_check
          %p359 = pneg %p170
        $region30: #{tpu_custom_call.1} parent=11 // pred_check_branch
          %361 = sbr.rel (%p359) target = $region32
        $region31: #{tpu_custom_call.1} parent=11 // pred_region
          _
        $region32: #{tpu_custom_call.1} parent=11 // pred_fallthru
          _
        // Predicated region
        $region33: #{tpu_custom_call.1} parent=11 // pred_check
          %p362 = pneg %p191
        $region34: #{tpu_custom_call.1} parent=11 // pred_check_branch
          %364 = sbr.rel (%p362) target = $region36
        $region35: #{tpu_custom_call.1} parent=11 // pred_region
          _
        $region36: #{tpu_custom_call.1} parent=11 // pred_fallthru
          _
        // Predicated region
        $region37: #{tpu_custom_call.1} parent=11 // pred_check
          %p365 = pneg %p212
        $region38: #{tpu_custom_call.1} parent=11 // pred_check_branch
          %367 = sbr.rel (%p365) target = $region40
        $region39: #{tpu_custom_call.1} parent=11 // pred_region
          _
        $region40: #{tpu_custom_call.1} parent=11 // pred_fallthru
          _
        // Predicated region
        $region41: #{tpu_custom_call.1} parent=11 // pred_check
          %p368 = pneg %p233
        $region42: #{tpu_custom_call.1} parent=11 // pred_check_branch
          %370 = sbr.rel (%p368) target = $region44
        $region43: #{tpu_custom_call.1} parent=11 // pred_region
          _
        $region44: #{tpu_custom_call.1} parent=11 // pred_fallthru
          _
        // Predicated region
        $region45: #{tpu_custom_call.1} parent=11 // pred_check
          %p371 = pneg %p254
        $region46: #{tpu_custom_call.1} parent=11 // pred_check_branch
          %373 = sbr.rel (%p371) target = $region48
        $region47: #{tpu_custom_call.1} parent=11 // pred_region
          _
        $region48: #{tpu_custom_call.1} parent=11 // pred_fallthru
          _
        // Predicated region
        $region49: #{tpu_custom_call.1} parent=11 // pred_check
          %p374 = pneg %p275
        $region50: #{tpu_custom_call.1} parent=11 // pred_check_branch
          %376 = sbr.rel (%p374) target = $region52
        $region51: #{tpu_custom_call.1} parent=11 // pred_region
          _
        $region52: #{tpu_custom_call.1} parent=11 // pred_fallthru
          _
        // Predicated region
        $region53: #{tpu_custom_call.1} parent=11 // pred_check
          %p377 = pneg %p296
        $region54: #{tpu_custom_call.1} parent=11 // pred_check_branch
          %379 = sbr.rel (%p377) target = $region56
        $region55: #{tpu_custom_call.1} parent=11 // pred_region
          _
        $region56: #{tpu_custom_call.1} parent=11 // pred_fallthru
          _
      $region12: #{tpu_custom_call.1} parent=5 // pred_fallthru
        _
      %p380 = scmp.lt.s32.totalorder %s25, 4
      // Predicated region
      $region57: #{tpu_custom_call.1} parent=5 // pred_check
        %p381 = pneg %p380
      $region58: #{tpu_custom_call.1} parent=5 // pred_check_branch
        %383 = sbr.rel (%p381) target = $region60
      $region59: #{tpu_custom_call.1} parent=5 // pred_region
        // Predicated region
        $region61: #{tpu_custom_call.1} parent=59 // pred_check
          %p384 = pneg %p59
        $region62: #{tpu_custom_call.1} parent=59 // pred_check_branch
          %386 = sbr.rel (%p384) target = $region64
        $region63: #{tpu_custom_call.1} parent=59 // pred_region
          %s387 = sand.u32 %s49, 1
          %s388 = scalar_lea.sflag [#allocation9], %s387
          %s389 = sand.u32 %s49, 1
          %s390 = smul.addr %s389, 8
          %s391 = scalar_lea.vmem [#allocation8], %s390
          %s393 = ssub.s32 128, 128
          %394 = vsyncadd %s388, %s393
          %s395 = smul.addr %s32, 2
          %s396 = sadd.s32 %s33, %s395
          %s397 = smul.addr %s396, 128
          %s398 = scalar_lea.hbm %s0, %s397
          %s400 = sshll.u32 %s391, 4
          %s401 = int_to_ptr.vmem [resolvable:$true] %s400
          %403 = dma.hbm_to_vmem [thread:$0]  %s398, 128, %s401, %s388
        $region64: #{tpu_custom_call.1} parent=59 // pred_fallthru
          _
      $region60: #{tpu_custom_call.1} parent=5 // pred_fallthru
        _
      %p404 = scmp.le.s32.totalorder 1, %s25
      %p405 = scmp.lt.s32.totalorder %s25, 5
      %p406 = pnand %p404, %p405
      %p407 = pneg %p406
      // Predicated region
      $region65: #{tpu_custom_call.1} parent=5 // pred_check
        _
      $region66: #{tpu_custom_call.1} parent=5 // pred_check_branch
        %409 = sbr.rel (%p406) target = $region68
      $region67: #{tpu_custom_call.1} parent=5 // pred_region
        %s410 = ssub.s32 %s25, 1
        %s411 = sand.u32 %s52, 1
        %s412 = scalar_lea.sflag [#allocation9], %s411
        %s413 = sand.u32 %s52, 1
        %s414 = smul.addr %s413, 8
        %s415 = scalar_lea.vmem [#allocation8], %s414
        // Predicated region
        $region69: #{tpu_custom_call.1} parent=67 // pred_check
          %p416 = pneg %p65
        $region70: #{tpu_custom_call.1} parent=67 // pred_check_branch
          %418 = sbr.rel (%p416) target = $region72
        $region71: #{tpu_custom_call.1} parent=67 // pred_region
          %419 = dma.done %s412, 128
        $region72: #{tpu_custom_call.1} parent=67 // pred_fallthru
          _
        // Predicated region
        $region73: #{tpu_custom_call.1} parent=67 // pred_check
          %p420 = pneg %p107
        $region74: #{tpu_custom_call.1} parent=67 // pred_check_branch
          %422 = sbr.rel (%p420) target = $region76
        $region75: #{tpu_custom_call.1} parent=67 // pred_region
          %423 = dma.done [#allocation12], 128
        $region76: #{tpu_custom_call.1} parent=67 // pred_fallthru
          _
        %s424 = sand.u32 %s52, 1
        %s425 = scalar_lea.sflag [#allocation9], %s424
        %s426 = sand.u32 %s52, 1
        %s427 = smul.addr %s426, 8
        %s428 = scalar_lea.vmem [#allocation8], %s427
        %p429 = pneg %p65
        %p430 = pneg %p62
        %p431 = pneg %p86
        %p432 = pneg %p83
        %p433 = pneg %p107
        %p434 = pneg %p104
        %p435 = pneg %p128
        %p436 = pneg %p125
        %p437 = pneg %p149
        %p438 = pneg %p146
        %p439 = pneg %p170
        %p440 = pneg %p167
        %p441 = pneg %p191
        %p442 = pneg %p188
        %p443 = pneg %p212
        %p444 = pneg %p209
        %p445 = pneg %p233
        %p446 = pneg %p230
        %p447 = pneg %p254
        %p448 = pneg %p251
        %p449 = pneg %p275
        %p450 = pneg %p272
        %p451 = pneg %p296
        %p452 = pneg %p293
        %p453 = pneg %p324
        %p454 = pneg %p321
        %s455 = sand.u32 %s311, 1
        %s456 = scalar_lea.sflag [#allocation10], %s455
        %s457 = sand.u32 %s311, 1
        %s458 = smul.addr %s457, 8
        %s459 = scalar_lea.vmem [#allocation13], %s458
        %p461 = scmp.eq.s32.totalorder %s35, 0
        // Predicated region
        $region77: #{tpu_custom_call.1} parent=67 // pred_check
          %p462 = pneg %p461
        $region78: #{tpu_custom_call.1} parent=67 // pred_check_branch
          %464 = sbr.rel (%p462) target = $region80
        $region79: #{tpu_custom_call.1} parent=67 // pred_region
          %vm465 = vcmask 523264
          %466 = vst.msk [vmem:[#allocation2] sm:$0xff] %vm465, 0.0
          %467 = vst.msk [vmem:[#allocation2 + $0x8] sm:$0xff] %vm465, 0.0
          %468 = vst.msk [vmem:[#allocation2 + $0x10] sm:$0xff] %vm465, 0.0
          %469 = vst.msk [vmem:[#allocation2 + $0x18] sm:$0xff] %vm465, 0.0
          %470 = vst.msk [vmem:[#allocation2 + $0x20] sm:$0xff] %vm465, 0.0
          %471 = vst.msk [vmem:[#allocation2 + $0x28] sm:$0xff] %vm465, 0.0
          %472 = vst.msk [vmem:[#allocation2 + $0x30] sm:$0xff] %vm465, 0.0
          %473 = vst.msk [vmem:[#allocation2 + $0x38] sm:$0xff] %vm465, 0.0
          %474 = vst [vmem:[#allocation3] sm:$0xff] 0.0
          %475 = vst.msk [vmem:[#allocation3 + $0x8] sm:$0xff] %vm465, 0.0
          %476 = vst [vmem:[#allocation3 + $0x10] sm:$0xff] 0.0
          %477 = vst.msk [vmem:[#allocation3 + $0x18] sm:$0xff] %vm465, 0.0
        $region80: #{tpu_custom_call.1} parent=67 // pred_fallthru
          _
        %v478 = vld [vmem:[%s415] sm:$0xff]
        %v479 = vpack.c.bf16 %v478, %v478
        %v480 = vld [vmem:[%s1] sm:$0xff]
        %v481 = vld [vmem:[%s1 + $0x8] sm:$0xf]
        %v482 = vld [vmem:[%s1 + $0xc] sm:$0xff]
        %v483 = vld [vmem:[%s1 + $0x14] sm:$0xf]
        %v484 = vld [vmem:[%s1 + $0x18] sm:$0xff]
        %v485 = vld [vmem:[%s1 + $0x20] sm:$0xf]
        %v486 = vld [vmem:[%s1 + $0x24] sm:$0xff]
        %v487 = vld [vmem:[%s1 + $0x2c] sm:$0xf]
        %v496 = vunpack.c.l.b16 %v480
        %v497 = vunpack.c.h.b16 %v480
        %v498 = vunpack.c.l.b16 %v481
        %v499 = vunpack.c.l.b16 %v482
        %v500 = vunpack.c.h.b16 %v482
        %v501 = vunpack.c.l.b16 %v483
        %v502 = vunpack.c.l.b16 %v484
        %v503 = vunpack.c.h.b16 %v484
        %v504 = vunpack.c.l.b16 %v485
        %v505 = vunpack.c.l.b16 %v486
        %v506 = vunpack.c.h.b16 %v486
        %v507 = vunpack.c.l.b16 %v487
        %v508 = vpack.c.b16 %v499, %v496
        %v509 = vpack.c.b16 %v500, %v497
        %v510 = vpack.c.b16 %v501, %v498
        %v511 = vpack.c.b16 %v505, %v502
        %v512 = vpack.c.b16 %v506, %v503
        %v513 = vpack.c.b16 %v507, %v504
        %vm520 = vcmask 261120
        %v522 = vsel %vm520, %v479, 0
        %524 = vmatprep.subr.bf16.mxu0 %v509
        %525 = vmatpush1.bf16.msra.mxu0 %v508
        %526 = vmatprep.subr.bf16.mxu0 %v512
        %527 = vmatpush1.bf16.msra.mxu0 %v511
        %528 = vmatprep.subr.bf16.mxu0 0
        %529 = vmatpush1.bf16.msra.mxu0 0
        %530 = vmatprep.subr.bf16.mxu0 0
        %531 = vmatpush1.bf16.msra.mxu0 0
        %532 = vmatprep.subr.bf16.mxu0 0
        %533 = vmatpush1.bf16.msra.mxu0 0
        %534 = vmatprep.subr.bf16.mxu0 0
        %535 = vmatpush1.bf16.msra.mxu0 0
        %536 = vmatprep.subr.bf16.mxu0 0
        %537 = vmatpush1.bf16.msra.mxu0 0
        %538 = vmatprep.subr.bf16.mxu0 0
        %539 = vmatpush1.bf16.msra.mxu0 0
        %540 = vmatprep.subr.bf16.mxu0 0
        %541 = vmatpush1.bf16.msra.mxu0 0
        %542 = vmatprep.subr.bf16.mxu0 0
        %543 = vmatpush1.bf16.msra.mxu0 0
        %544 = vmatprep.subr.bf16.mxu0 0
        %545 = vmatpush1.bf16.msra.mxu0 0
        %546 = vmatprep.subr.bf16.mxu0 0
        %547 = vmatpush1.bf16.msra.mxu0 0
        %548 = vmatprep.subr.bf16.mxu0 0
        %549 = vmatpush1.bf16.msra.mxu0 0
        %550 = vmatprep.subr.bf16.mxu0 0
        %551 = vmatpush1.bf16.msra.mxu0 0
        %552 = vmatprep.subr.bf16.mxu0 0
        %553 = vmatpush1.bf16.msra.mxu0 0
        %554 = vmatprep.subr.bf16.mxu0 0
        %555 = vmatpush1.bf16.msra.mxu0 0
        %556 = vmatprep.mubr.bf16.mxu0 0
        %557 = vmatmul.mubr.bf16.gmra.mrb[0].mxu0 %v522
        %v558 = vpop.f32.mrb[0].mxu0
        %v559 = vadd.f32 0.0, %v558
        %v560 = vpop.f32.mrb[0].mxu0
        %v561 = vadd.f32 0.0, %v560
        %v562 = vpop.f32.mrb[0].mxu0
        %v563 = vpop.f32.mrb[0].mxu0
        %564 = vdwg.mxu0
        %565 = vmatprep.subr.bf16.mxu0 0
        %566 = vmatpush1.bf16.msra.mxu0 %v510
        %567 = vmatprep.subr.bf16.mxu0 0
        %568 = vmatpush1.bf16.msra.mxu0 %v513
        %569 = vmatprep.subr.bf16.mxu0 0
        %570 = vmatpush1.bf16.msra.mxu0 0
        %571 = vmatprep.subr.bf16.mxu0 0
        %572 = vmatpush1.bf16.msra.mxu0 0
        %573 = vmatprep.subr.bf16.mxu0 0
        %574 = vmatpush1.bf16.msra.mxu0 0
        %575 = vmatprep.subr.bf16.mxu0 0
        %576 = vmatpush1.bf16.msra.mxu0 0
        %577 = vmatprep.subr.bf16.mxu0 0
        %578 = vmatpush1.bf16.msra.mxu0 0
        %579 = vmatprep.subr.bf16.mxu0 0
        %580 = vmatpush1.bf16.msra.mxu0 0
        %581 = vmatprep.subr.bf16.mxu0 0
        %582 = vmatpush1.bf16.msra.mxu0 0
        %583 = vmatprep.subr.bf16.mxu0 0
        %584 = vmatpush1.bf16.msra.mxu0 0
        %585 = vmatprep.subr.bf16.mxu0 0
        %586 = vmatpush1.bf16.msra.mxu0 0
        %587 = vmatprep.subr.bf16.mxu0 0
        %588 = vmatpush1.bf16.msra.mxu0 0
        %589 = vmatprep.subr.bf16.mxu0 0
        %590 = vmatpush1.bf16.msra.mxu0 0
        %591 = vmatprep.subr.bf16.mxu0 0
        %592 = vmatpush1.bf16.msra.mxu0 0
        %593 = vmatprep.subr.bf16.mxu0 0
        %594 = vmatpush1.bf16.msra.mxu0 0
        %595 = vmatprep.subr.bf16.mxu0 0
        %596 = vmatpush1.bf16.msra.mxu0 0
        %597 = vmatprep.mubr.bf16.mxu0 0
        %598 = vmatmul.mubr.bf16.gmra.mrb[0].mxu0 %v522
        %v599 = vpop.f32.mrb[0].mxu0
        %v600 = vadd.f32 0.0, %v599
        %v601 = vpop.f32.mrb[0].mxu0
        %v602 = vpop.f32.mrb[0].mxu0
        %v603 = vpop.f32.mrb[0].mxu0
        %604 = vdwg.mxu0
        %v605 = vld [vmem:[%s4] sm:$0x1]
        %v607 = vlaneseq
        %v608 = vshrl.u32 %v607, 7
        %v609 = vsub.s32 0, %v608
        %v610 = vrot.slane %v605, %v609
        %v612 = vadd.f32 %v600, %v610
        %v613 = vmax.f32 %v612, 0.0
        %v614 = vand.u32 2147483647, %v612
        %v615 = vsub.f32 0.0, %v614
        %v616 = vmul.f32 %v615, 1.442695
        %v617 = vpow.pop %v616
        %v618 = vadd.f32 %v617, 1.0
        %v619 = vlog2.pop %v618
        %v620 = vmul.f32 %v619, 0.6931472
        %v621 = vadd.f32 %v613, %v620
        %624 = vrot.lane.b32.xlu0 %v559, 64
        %v625 = vpop.permute.xlu0 %624
        %626 = vrot.lane.b32.xlu0 %v561, 64
        %v627 = vpop.permute.xlu0 %626
        %vm628 = vcmask 523264
        %v629 = vsel %vm628, %v625, %v627
        %632 = vst [vmem:[#allocation3 + $0x10] sm:$0xff] %v629
        %633 = vst.msk [vmem:[#allocation3 + $0x18] sm:$0xff] %vm628, %v627
        %v634 = vld [vmem:[%s3] sm:$0x3]
        %v635 = vld [vmem:[#allocation3] sm:$0xe0]
        %v636 = vld [vmem:[#allocation3 + $0x8] sm:$0xe0]
        %v637 = vld [vmem:[#allocation3 + $0x10] sm:$0x1f]
        %v638 = vld [vmem:[#allocation3 + $0x18] sm:$0x1f]
        %v639 = vld [vmem:[#allocation11] ss:$4 sm:$0x3]
        %v641 = vlaneseq
        %v642 = vshrl.u32 %v641, 7
        %v643 = vsub.s32 0, %v642
        %v644 = vrot.slane %v639, %v643
        %v645 = vlaneseq
        %v646 = vshrl.u32 %v645, 7
        %v647 = vsub.s32 1, %v646
        %v648 = vrot.slane %v639, %v647
        %v651 = vmul.f32 %v635, %v644
        %v652 = vmul.f32 %v636, %v648
        %v653 = vmul.f32 %v637, %v644
        %v654 = vmul.f32 %v638, %v648
        %v656 = vlaneseq
        %v657 = vshrl.u32 %v656, 7
        %v658 = vsub.s32 0, %v657
        %v659 = vrot.slane %v634, %v658
        %v660 = vlaneseq
        %v661 = vshrl.u32 %v660, 7
        %v662 = vsub.s32 1, %v661
        %v663 = vrot.slane %v634, %v662
        %v666 = vadd.f32 %v659, %v651
        %v667 = vadd.f32 %v663, %v652
        %v668 = vadd.f32 %v659, %v653
        %v669 = vadd.f32 %v663, %v654
        %v670 = vld [vmem:[#allocation3] sm:$0xc0]
        %v671 = vld [vmem:[#allocation3 + $0x8] sm:$0xc0]
        %v672 = vld [vmem:[#allocation3 + $0x10] sm:$0x3f]
        %v673 = vld [vmem:[#allocation3 + $0x18] sm:$0x3f]
        %s674 = scalar_lea.vmem [#allocation11], 1
        %v675 = vld [vmem:[%s674] ss:$4 sm:$0x3]
        %v677 = vlaneseq
        %v678 = vshrl.u32 %v677, 7
        %v679 = vsub.s32 0, %v678
        %v680 = vrot.slane %v675, %v679
        %v681 = vlaneseq
        %v682 = vshrl.u32 %v681, 7
        %v683 = vsub.s32 1, %v682
        %v684 = vrot.slane %v675, %v683
        %v687 = vmul.f32 %v670, %v680
        %v688 = vmul.f32 %v671, %v684
        %v689 = vmul.f32 %v672, %v680
        %v690 = vmul.f32 %v673, %v684
        %vm695 = vcmask 1046528
        %v696 = vrot.slane %v687, 1
        %v697 = vrot.slane %v689, 1
        %v698 = vsel %vm695, %v696, %v697
        %v699 = vrot.slane %v688, 1
        %v700 = vrot.slane %v690, 1
        %v701 = vsel %vm695, %v699, %v700
        %v706 = vadd.f32 %v666, %v698
        %v707 = vadd.f32 %v667, %v701
        %v708 = vadd.f32 %v668, %v697
        %v709 = vadd.f32 %v669, %v700
        %v710 = vld [vmem:[#allocation3] sm:$0x80]
        %v711 = vld [vmem:[#allocation3 + $0x8] sm:$0x80]
        %v712 = vld [vmem:[#allocation3 + $0x10] sm:$0x7f]
        %v713 = vld [vmem:[#allocation3 + $0x18] sm:$0x7f]
        %s714 = scalar_lea.vmem [#allocation11], 2
        %v715 = vld [vmem:[%s714] ss:$4 sm:$0x3]
        %v717 = vlaneseq
        %v718 = vshrl.u32 %v717, 7
        %v719 = vsub.s32 0, %v718
        %v720 = vrot.slane %v715, %v719
        %v721 = vlaneseq
        %v722 = vshrl.u32 %v721, 7
        %v723 = vsub.s32 1, %v722
        %v724 = vrot.slane %v715, %v723
        %v727 = vmul.f32 %v710, %v720
        %v728 = vmul.f32 %v711, %v724
        %v729 = vmul.f32 %v712, %v720
        %v730 = vmul.f32 %v713, %v724
        %vm735 = vcmask 1045504
        %v736 = vrot.slane %v727, 2
        %v737 = vrot.slane %v729, 2
        %v738 = vsel %vm735, %v736, %v737
        %v739 = vrot.slane %v728, 2
        %v740 = vrot.slane %v730, 2
        %v741 = vsel %vm735, %v739, %v740
        %v746 = vadd.f32 %v706, %v738
        %v747 = vadd.f32 %v707, %v741
        %v748 = vadd.f32 %v708, %v737
        %v749 = vadd.f32 %v709, %v740
        %v750 = vld [vmem:[#allocation3 + $0x10] sm:$0xff]
        %v751 = vld [vmem:[#allocation3 + $0x18] sm:$0xff]
        %s752 = scalar_lea.vmem [#allocation11], 3
        %v753 = vld [vmem:[%s752] ss:$4 sm:$0x3]
        %v755 = vlaneseq
        %v756 = vshrl.u32 %v755, 7
        %v757 = vsub.s32 0, %v756
        %v758 = vrot.slane %v753, %v757
        %v759 = vlaneseq
        %v760 = vshrl.u32 %v759, 7
        %v761 = vsub.s32 1, %v760
        %v762 = vrot.slane %v753, %v761
        %v765 = vmul.f32 %v750, %v758
        %v766 = vmul.f32 %v751, %v762
        %v769 = vrot.slane %v765, 3
        %v770 = vrot.slane %v766, 3
        %v773 = vadd.f32 %v746, %v769
        %v774 = vadd.f32 %v747, %v770
        %v775 = vadd.f32 %v748, %v769
        %v776 = vadd.f32 %v749, %v770
        %777 = vst [vmem:[#allocation3] sm:$0xe0] %v629
        %vm778 = vcmask 523269
        %779 = vst.msk [vmem:[#allocation3 + $0x8] sm:$0xe0] %vm778, %v627
        %v780 = vsub.f32 0.0, %v773
        %v781 = vsub.f32 0.0, %v774
        %v782 = vsub.f32 0.0, %v775
        %v783 = vsub.f32 0.0, %v776
        %v784 = vmul.f32 %v780, 1.442695
        %v785 = vpow.pop %v784
        %v786 = vmul.f32 %v781, 1.442695
        %v787 = vpow.pop %v786
        %v788 = vmul.f32 %v782, 1.442695
        %v789 = vpow.pop %v788
        %v790 = vmul.f32 %v783, 1.442695
        %v791 = vpow.pop %v790
        %v792 = vadd.f32 %v785, 1.0
        %v793 = vadd.f32 %v787, 1.0
        %v794 = vadd.f32 %v789, 1.0
        %v795 = vadd.f32 %v791, 1.0
        %v796 = vrcp.pop %v792
        %v797 = vmul.f32 1.0, %v796
        %v798 = vrcp.pop %v793
        %v799 = vmul.f32 1.0, %v798
        %v800 = vrcp.pop %v794
        %v801 = vmul.f32 1.0, %v800
        %v802 = vrcp.pop %v795
        %v803 = vmul.f32 1.0, %v802
        %v804 = vmul.f32 %v773, %v797
        %v805 = vmul.f32 %v774, %v799
        %v806 = vmul.f32 %v775, %v801
        %v807 = vmul.f32 %v776, %v803
        %v808 = vpack.c.bf16 %v806, %v804
        %v809 = vpack.c.bf16 %v807, %v805
        %v810 = vlaneseq
        %v811 = vshrl.u32 %v810, 7
        %v812 = vlaneseq
        %v813 = vand.u32 %v812, 127
        %vm814 = vcmp.ge.s32.totalorder %v811, %v813
        %v815 = vsel %vm814, 1.0, 0.0
        %v816 = vsel %vm814, 0.0, -1e+30
        %v817 = vld [vmem:[%s5] sm:$0x1]
        %v819 = vlaneseq
        %v820 = vshrl.u32 %v819, 7
        %v821 = vsub.s32 0, %v820
        %v822 = vrot.slane %v817, %v821
        %v824 = vmul.f32 %v621, %v822
        %vm825 = vcmask 64512
        %v827 = vsel %vm825, %v815, 0
        %829 = vmatprep.subr.mxu0 0.0
        %830 = vmatpush1.msra.mxu0 %v824
        %831 = vmatprep.subr.mxu0 0.0
        %832 = vmatpush1.msra.mxu0 0.0
        %833 = vmatprep.subr.mxu0 0.0
        %834 = vmatpush1.msra.mxu0 0.0
        %835 = vmatprep.subr.mxu0 0.0
        %836 = vmatpush1.msra.mxu0 0.0
        %837 = vmatprep.subr.mxu0 0.0
        %838 = vmatpush1.msra.mxu0 0.0
        %839 = vmatprep.subr.mxu0 0.0
        %840 = vmatpush1.msra.mxu0 0.0
        %841 = vmatprep.subr.mxu0 0.0
        %842 = vmatpush1.msra.mxu0 0.0
        %843 = vmatprep.subr.mxu0 0.0
        %844 = vmatpush1.msra.mxu0 0.0
        %845 = vmatprep.subr.mxu0 0.0
        %846 = vmatpush1.msra.mxu0 0.0
        %847 = vmatprep.subr.mxu0 0.0
        %848 = vmatpush1.msra.mxu0 0.0
        %849 = vmatprep.subr.mxu0 0.0
        %850 = vmatpush1.msra.mxu0 0.0
        %851 = vmatprep.subr.mxu0 0.0
        %852 = vmatpush1.msra.mxu0 0.0
        %853 = vmatprep.subr.mxu0 0.0
        %854 = vmatpush1.msra.mxu0 0.0
        %855 = vmatprep.subr.mxu0 0.0
        %856 = vmatpush1.msra.mxu0 0.0
        %857 = vmatprep.subr.mxu0 0.0
        %858 = vmatpush1.msra.mxu0 0.0
        %859 = vmatprep.subr.mxu0 0.0
        %860 = vmatpush1.msra.mxu0 0.0
        %861 = vmatprep.subr.mxu0 0.0
        %862 = vmatpush1.msra.mxu0 0.0
        %863 = vmatprep.subr.mxu0 0.0
        %864 = vmatpush1.msra.mxu0 0.0
        %865 = vmatprep.subr.mxu0 0.0
        %866 = vmatpush1.msra.mxu0 0.0
        %867 = vmatprep.subr.mxu0 0.0
        %868 = vmatpush1.msra.mxu0 0.0
        %869 = vmatprep.subr.mxu0 0.0
        %870 = vmatpush1.msra.mxu0 0.0
        %871 = vmatprep.subr.mxu0 0.0
        %872 = vmatpush1.msra.mxu0 0.0
        %873 = vmatprep.subr.mxu0 0.0
        %874 = vmatpush1.msra.mxu0 0.0
        %875 = vmatprep.subr.mxu0 0.0
        %876 = vmatpush1.msra.mxu0 0.0
        %877 = vmatprep.subr.mxu0 0.0
        %878 = vmatpush1.msra.mxu0 0.0
        %879 = vmatprep.subr.mxu0 0.0
        %880 = vmatpush1.msra.mxu0 0.0
        %881 = vmatprep.subr.mxu0 0.0
        %882 = vmatpush1.msra.mxu0 0.0
        %883 = vmatprep.subr.mxu0 0.0
        %884 = vmatpush1.msra.mxu0 0.0
        %885 = vmatprep.subr.mxu0 0.0
        %886 = vmatpush1.msra.mxu0 0.0
        %887 = vmatprep.subr.mxu0 0.0
        %888 = vmatpush1.msra.mxu0 0.0
        %889 = vmatprep.subr.mxu0 0.0
        %890 = vmatpush1.msra.mxu0 0.0
        %891 = vmatprep.subr.mxu0 0.0
        %892 = vmatpush1.msra.mxu0 0.0
        %893 = vmatprep.mubr.f32.mxu0 0.0
        %894 = vmatmul.mubr.f32.gmra.mrb[0].mxu0 %v827
        %v895 = vpop.f32.mrb[0].mxu0
        %v896 = vadd.f32 0.0, %v895
        %v897 = vpop.f32.mrb[0].mxu0
        %898 = vdwg.mxu0
        %v899 = vld [vmem:[%s11] sm:$0x3]
        %v901 = vshrl.u32 %v809, 16
        %v903 = vrot.slane %v901, 2
        %v904 = vshll.u32 %v809, 16
        %v906 = vrot.slane %v904, 3
        %v907 = vor.u32 %v903, %v906
        %v909 = vshrl.u32 %v808, 16
        %v911 = vrot.slane %v909, 2
        %v912 = vshll.u32 %v808, 16
        %v914 = vrot.slane %v912, 3
        %v915 = vor.u32 %v911, %v914
        %916 = vrot.lane.b32.xlu0 %v915, 64
        %v917 = vpop.permute.xlu0 %916
        %v919 = vsel %vm628, %v907, 0
        %v922 = vsel %vm628, %v917, 0
        %924 = vmatprep.subr.bf16.mxu0 0
        %925 = vmatpush1.bf16.xpose.msra.mxu0 %v922
        %926 = vmatprep.subr.bf16.mxu0 0
        %927 = vmatpush1.bf16.xpose.msra.mxu0 0
        %928 = vmatprep.subr.bf16.mxu0 0
        %929 = vmatpush1.bf16.xpose.msra.mxu0 0
        %930 = vmatprep.subr.bf16.mxu0 0
        %931 = vmatpush1.bf16.xpose.msra.mxu0 0
        %932 = vmatprep.subr.bf16.mxu0 0
        %933 = vmatpush1.bf16.xpose.msra.mxu0 0
        %934 = vmatprep.subr.bf16.mxu0 0
        %935 = vmatpush1.bf16.xpose.msra.mxu0 0
        %936 = vmatprep.subr.bf16.mxu0 0
        %937 = vmatpush1.bf16.xpose.msra.mxu0 0
        %938 = vmatprep.subr.bf16.mxu0 0
        %939 = vmatpush1.bf16.xpose.msra.mxu0 0
        %940 = vmatprep.subr.bf16.mxu0 0
        %941 = vmatpush1.bf16.xpose.msra.mxu0 0
        %942 = vmatprep.subr.bf16.mxu0 0
        %943 = vmatpush1.bf16.xpose.msra.mxu0 0
        %944 = vmatprep.subr.bf16.mxu0 0
        %945 = vmatpush1.bf16.xpose.msra.mxu0 0
        %946 = vmatprep.subr.bf16.mxu0 0
        %947 = vmatpush1.bf16.xpose.msra.mxu0 0
        %948 = vmatprep.subr.bf16.mxu0 0
        %949 = vmatpush1.bf16.xpose.msra.mxu0 0
        %950 = vmatprep.subr.bf16.mxu0 0
        %951 = vmatpush1.bf16.xpose.msra.mxu0 0
        %952 = vmatprep.subr.bf16.mxu0 0
        %953 = vmatpush1.bf16.xpose.msra.mxu0 0
        %954 = vmatprep.subr.bf16.mxu0 0
        %955 = vmatpush1.bf16.xpose.msra.mxu0 0
        %956 = vmatprep.mubr.bf16.mxu0 0
        %957 = vmatmul.mubr.bf16.gmra.mrb[0].mxu0 %v919
        %v958 = vpop.f32.mrb[0].mxu0
        %v959 = vadd.f32 0.0, %v958
        %v960 = vpop.f32.mrb[0].mxu0
        %v961 = vpop.f32.mrb[0].mxu0
        %v962 = vpop.f32.mrb[0].mxu0
        %963 = vdwg.mxu0
        %v964 = vld [vmem:[#allocation2] sm:$0xff]
        %v965 = vld [vmem:[#allocation2 + $0x8] sm:$0xff]
        %v966 = vld [vmem:[#allocation2 + $0x10] sm:$0xff]
        %v967 = vld [vmem:[#allocation2 + $0x18] sm:$0xff]
        %v968 = vld [vmem:[#allocation2 + $0x20] sm:$0xff]
        %v969 = vld [vmem:[#allocation2 + $0x28] sm:$0xff]
        %v970 = vld [vmem:[#allocation2 + $0x30] sm:$0xff]
        %v971 = vld [vmem:[#allocation2 + $0x38] sm:$0xff]
        %v972 = vpack.c.bf16 %v965, %v964
        %v973 = vpack.c.bf16 %v967, %v966
        %v974 = vpack.c.bf16 %v969, %v968
        %v975 = vpack.c.bf16 %v971, %v970
        %976 = vmatprep.subr.bf16.mxu0 0
        %977 = vmatpush1.bf16.msra.mxu0 %v972
        %978 = vmatprep.subr.bf16.mxu0 0
        %979 = vmatpush1.bf16.msra.mxu0 %v973
        %980 = vmatprep.subr.bf16.mxu0 0
        %981 = vmatpush1.bf16.msra.mxu0 %v974
        %982 = vmatprep.subr.bf16.mxu0 0
        %983 = vmatpush1.bf16.msra.mxu0 %v975
        %984 = vmatprep.subr.bf16.mxu0 0
        %985 = vmatpush1.bf16.msra.mxu0 0
        %986 = vmatprep.subr.bf16.mxu0 0
        %987 = vmatpush1.bf16.msra.mxu0 0
        %988 = vmatprep.subr.bf16.mxu0 0
        %989 = vmatpush1.bf16.msra.mxu0 0
        %990 = vmatprep.subr.bf16.mxu0 0
        %991 = vmatpush1.bf16.msra.mxu0 0
        %992 = vmatprep.subr.bf16.mxu0 0
        %993 = vmatpush1.bf16.msra.mxu0 0
        %994 = vmatprep.subr.bf16.mxu0 0
        %995 = vmatpush1.bf16.msra.mxu0 0
        %996 = vmatprep.subr.bf16.mxu0 0
        %997 = vmatpush1.bf16.msra.mxu0 0
        %998 = vmatprep.subr.bf16.mxu0 0
        %999 = vmatpush1.bf16.msra.mxu0 0
        %1000 = vmatprep.subr.bf16.mxu0 0
        %1001 = vmatpush1.bf16.msra.mxu0 0
        %1002 = vmatprep.subr.bf16.mxu0 0
        %1003 = vmatpush1.bf16.msra.mxu0 0
        %1004 = vmatprep.subr.bf16.mxu0 0
        %1005 = vmatpush1.bf16.msra.mxu0 0
        %1006 = vmatprep.subr.bf16.mxu0 0
        %1007 = vmatpush1.bf16.msra.mxu0 0
        %1008 = vmatprep.mubr.bf16.mxu0 0
        %1009 = vmatmul.mubr.bf16.gmra.mrb[0].mxu0 %v919
        %v1010 = vpop.f32.mrb[0].mxu0
        %v1011 = vadd.f32 0.0, %v1010
        %v1012 = vpop.f32.mrb[0].mxu0
        %v1013 = vpop.f32.mrb[0].mxu0
        %v1014 = vpop.f32.mrb[0].mxu0
        %1015 = vdwg.mxu0
        %v1016 = vmul.f32 %v896, 1.442695
        %v1017 = vpow.pop %v1016
        %vm1018 = vcmask 15360
        %v1020 = vsel %vm1018, %v1017, 0
        %vm1022 = vcmask 1041408
        %v1024 = vsel %vm1022, %v899, 0
        %1026 = vmatprep.subr.mxu0 0.0
        %1027 = vmatpush1.msra.mxu0 %v1024
        %1028 = vmatprep.subr.mxu0 0.0
        %1029 = vmatpush1.msra.mxu0 0.0
        %1030 = vmatprep.subr.mxu0 0.0
        %1031 = vmatpush1.msra.mxu0 0.0
        %1032 = vmatprep.subr.mxu0 0.0
        %1033 = vmatpush1.msra.mxu0 0.0
        %1034 = vmatprep.subr.mxu0 0.0
        %1035 = vmatpush1.msra.mxu0 0.0
        %1036 = vmatprep.subr.mxu0 0.0
        %1037 = vmatpush1.msra.mxu0 0.0
        %1038 = vmatprep.subr.mxu0 0.0
        %1039 = vmatpush1.msra.mxu0 0.0
        %1040 = vmatprep.subr.mxu0 0.0
        %1041 = vmatpush1.msra.mxu0 0.0
        %1042 = vmatprep.subr.mxu0 0.0
        %1043 = vmatpush1.msra.mxu0 0.0
        %1044 = vmatprep.subr.mxu0 0.0
        %1045 = vmatpush1.msra.mxu0 0.0
        %1046 = vmatprep.subr.mxu0 0.0
        %1047 = vmatpush1.msra.mxu0 0.0
        %1048 = vmatprep.subr.mxu0 0.0
        %1049 = vmatpush1.msra.mxu0 0.0
        %1050 = vmatprep.subr.mxu0 0.0
        %1051 = vmatpush1.msra.mxu0 0.0
        %1052 = vmatprep.subr.mxu0 0.0
        %1053 = vmatpush1.msra.mxu0 0.0
        %1054 = vmatprep.subr.mxu0 0.0
        %1055 = vmatpush1.msra.mxu0 0.0
        %1056 = vmatprep.subr.mxu0 0.0
        %1057 = vmatpush1.msra.mxu0 0.0
        %1058 = vmatprep.subr.mxu0 0.0
        %1059 = vmatpush1.msra.mxu0 0.0
        %1060 = vmatprep.subr.mxu0 0.0
        %1061 = vmatpush1.msra.mxu0 0.0
        %1062 = vmatprep.subr.mxu0 0.0
        %1063 = vmatpush1.msra.mxu0 0.0
        %1064 = vmatprep.subr.mxu0 0.0
        %1065 = vmatpush1.msra.mxu0 0.0
        %1066 = vmatprep.subr.mxu0 0.0
        %1067 = vmatpush1.msra.mxu0 0.0
        %1068 = vmatprep.subr.mxu0 0.0
        %1069 = vmatpush1.msra.mxu0 0.0
        %1070 = vmatprep.subr.mxu0 0.0
        %1071 = vmatpush1.msra.mxu0 0.0
        %1072 = vmatprep.subr.mxu0 0.0
        %1073 = vmatpush1.msra.mxu0 0.0
        %1074 = vmatprep.subr.mxu0 0.0
        %1075 = vmatpush1.msra.mxu0 0.0
        %1076 = vmatprep.subr.mxu0 0.0
        %1077 = vmatpush1.msra.mxu0 0.0
        %1078 = vmatprep.subr.mxu0 0.0
        %1079 = vmatpush1.msra.mxu0 0.0
        %1080 = vmatprep.subr.mxu0 0.0
        %1081 = vmatpush1.msra.mxu0 0.0
        %1082 = vmatprep.subr.mxu0 0.0
        %1083 = vmatpush1.msra.mxu0 0.0
        %1084 = vmatprep.subr.mxu0 0.0
        %1085 = vmatpush1.msra.mxu0 0.0
        %1086 = vmatprep.subr.mxu0 0.0
        %1087 = vmatpush1.msra.mxu0 0.0
        %1088 = vmatprep.subr.mxu0 0.0
        %1089 = vmatpush1.msra.mxu0 0.0
        %1090 = vmatprep.mubr.f32.mxu0 0.0
        %1091 = vmatmul.mubr.f32.gmra.mrb[0].mxu0 %v1020
        %v1092 = vpop.f32.mrb[0].mxu0
        %v1093 = vadd.f32 0.0, %v1092
        %v1094 = vpop.f32.mrb[0].mxu0
        %1095 = vdwg.mxu0
        %v1096 = vmul.f32 %v1093, %v1011
        %v1097 = vld [vmem:[%s6] sm:$0x1]
        %v1099 = vlaneseq
        %v1100 = vshrl.u32 %v1099, 7
        %v1101 = vsub.s32 0, %v1100
        %v1102 = vrot.slane %v1097, %v1101
        %v1104 = vmul.f32 %v1102, %v804
        %v1105 = vmul.f32 %v1102, %v806
        %vm1108 = vcmask 1042432
        %v1109 = vrot.slane %v1104, 5
        %v1110 = vrot.slane %v1105, 5
        %v1111 = vsel %vm1108, %v1109, %v1110
        %v1113 = vadd.f32 %v1096, %v1111
        %v1114 = vlaneseq
        %v1115 = vshrl.u32 %v1114, 7
        %v1116 = vsub.s32 7, %v1115
        %v1117 = vrot.slane %v896, %v1116
        %v1118 = vsub.f32 %v1117, %v896
        %v1119 = vmul.f32 %v1118, 1.442695
        %v1120 = vpow.pop %v1119
        %v1121 = vmul.f32 %v1120, %v621
        %v1123 = vsel %vm1018, %v1121, 0
        %1125 = vmatprep.subr.mxu0 0.0
        %1126 = vmatpush1.msra.mxu0 %v1024
        %1127 = vmatprep.subr.mxu0 0.0
        %1128 = vmatpush1.msra.mxu0 0.0
        %1129 = vmatprep.subr.mxu0 0.0
        %1130 = vmatpush1.msra.mxu0 0.0
        %1131 = vmatprep.subr.mxu0 0.0
        %1132 = vmatpush1.msra.mxu0 0.0
        %1133 = vmatprep.subr.mxu0 0.0
        %1134 = vmatpush1.msra.mxu0 0.0
        %1135 = vmatprep.subr.mxu0 0.0
        %1136 = vmatpush1.msra.mxu0 0.0
        %1137 = vmatprep.subr.mxu0 0.0
        %1138 = vmatpush1.msra.mxu0 0.0
        %1139 = vmatprep.subr.mxu0 0.0
        %1140 = vmatpush1.msra.mxu0 0.0
        %1141 = vmatprep.subr.mxu0 0.0
        %1142 = vmatpush1.msra.mxu0 0.0
        %1143 = vmatprep.subr.mxu0 0.0
        %1144 = vmatpush1.msra.mxu0 0.0
        %1145 = vmatprep.subr.mxu0 0.0
        %1146 = vmatpush1.msra.mxu0 0.0
        %1147 = vmatprep.subr.mxu0 0.0
        %1148 = vmatpush1.msra.mxu0 0.0
        %1149 = vmatprep.subr.mxu0 0.0
        %1150 = vmatpush1.msra.mxu0 0.0
        %1151 = vmatprep.subr.mxu0 0.0
        %1152 = vmatpush1.msra.mxu0 0.0
        %1153 = vmatprep.subr.mxu0 0.0
        %1154 = vmatpush1.msra.mxu0 0.0
        %1155 = vmatprep.subr.mxu0 0.0
        %1156 = vmatpush1.msra.mxu0 0.0
        %1157 = vmatprep.subr.mxu0 0.0
        %1158 = vmatpush1.msra.mxu0 0.0
        %1159 = vmatprep.subr.mxu0 0.0
        %1160 = vmatpush1.msra.mxu0 0.0
        %1161 = vmatprep.subr.mxu0 0.0
        %1162 = vmatpush1.msra.mxu0 0.0
        %1163 = vmatprep.subr.mxu0 0.0
        %1164 = vmatpush1.msra.mxu0 0.0
        %1165 = vmatprep.subr.mxu0 0.0
        %1166 = vmatpush1.msra.mxu0 0.0
        %1167 = vmatprep.subr.mxu0 0.0
        %1168 = vmatpush1.msra.mxu0 0.0
        %1169 = vmatprep.subr.mxu0 0.0
        %1170 = vmatpush1.msra.mxu0 0.0
        %1171 = vmatprep.subr.mxu0 0.0
        %1172 = vmatpush1.msra.mxu0 0.0
        %1173 = vmatprep.subr.mxu0 0.0
        %1174 = vmatpush1.msra.mxu0 0.0
        %1175 = vmatprep.subr.mxu0 0.0
        %1176 = vmatpush1.msra.mxu0 0.0
        %1177 = vmatprep.subr.mxu0 0.0
        %1178 = vmatpush1.msra.mxu0 0.0
        %1179 = vmatprep.subr.mxu0 0.0
        %1180 = vmatpush1.msra.mxu0 0.0
        %1181 = vmatprep.subr.mxu0 0.0
        %1182 = vmatpush1.msra.mxu0 0.0
        %1183 = vmatprep.subr.mxu0 0.0
        %1184 = vmatpush1.msra.mxu0 0.0
        %1185 = vmatprep.subr.mxu0 0.0
        %1186 = vmatpush1.msra.mxu0 0.0
        %1187 = vmatprep.subr.mxu0 0.0
        %1188 = vmatpush1.msra.mxu0 0.0
        %1189 = vmatprep.mubr.f32.mxu0 0.0
        %1190 = vmatmul.mubr.f32.gmra.mrb[0].mxu0 %v1123
        %v1191 = vpop.f32.mrb[0].mxu0
        %v1192 = vadd.f32 0.0, %v1191
        %v1193 = vpop.f32.mrb[0].mxu0
        %1194 = vdwg.mxu0
        %v1197 = vrot.slane %v804, 5
        %v1198 = vrot.slane %v806, 5
        %v1199 = vsel %vm1108, %v1197, %v1198
        %v1201 = vmul.f32 %v1192, %v1199
        %v1202 = vpack.c.bf16 %v1201, %v1201
        %1204 = vxpose.xlu0.c.b16.start [1/8] %v917, 128
        %1205 = vxpose.xlu0.c.b16.cont [2/8] 0, 128
        %1206 = vxpose.xlu0.c.b16.cont [3/8] 0, 128
        %1207 = vxpose.xlu0.c.b16.cont [4/8] 0, 128
        %1208 = vxpose.xlu0.c.b16.cont [5/8] 0, 128
        %1209 = vxpose.xlu0.c.b16.cont [6/8] 0, 128
        %1210 = vxpose.xlu0.c.b16.cont [7/8] 0, 128
        %1211 = vxpose.xlu0.c.b16.end [8/8] 0, 128
        %v1212 = vpop.trf.xlu0
        %v1213 = vpop.trf.xlu0
        %v1214 = vpop.trf.xlu0
        %v1215 = vpop.trf.xlu0
        %v1216 = vpop.trf.xlu0
        %v1217 = vpop.trf.xlu0
        %v1218 = vpop.trf.xlu0
        %v1219 = vpop.trf.xlu0
        %v1221 = vsel %vm825, %v1212, 0
        %v1224 = vsel %vm825, %v1213, 0
        %v1227 = vsel %vm825, %v1214, 0
        %v1230 = vsel %vm825, %v1215, 0
        %vm1232 = vcmask 1043456
        %v1234 = vsel %vm1232, %v1202, 0
        %1236 = vmatprep.subr.bf16.mxu0 0
        %1237 = vmatpush1.bf16.msra.mxu0 %v1234
        %1238 = vmatprep.subr.bf16.mxu0 0
        %1239 = vmatpush1.bf16.msra.mxu0 0
        %1240 = vmatprep.subr.bf16.mxu0 0
        %1241 = vmatpush1.bf16.msra.mxu0 0
        %1242 = vmatprep.subr.bf16.mxu0 0
        %1243 = vmatpush1.bf16.msra.mxu0 0
        %1244 = vmatprep.subr.bf16.mxu0 0
        %1245 = vmatpush1.bf16.msra.mxu0 0
        %1246 = vmatprep.subr.bf16.mxu0 0
        %1247 = vmatpush1.bf16.msra.mxu0 0
        %1248 = vmatprep.subr.bf16.mxu0 0
        %1249 = vmatpush1.bf16.msra.mxu0 0
        %1250 = vmatprep.subr.bf16.mxu0 0
        %1251 = vmatpush1.bf16.msra.mxu0 0
        %1252 = vmatprep.subr.bf16.mxu0 0
        %1253 = vmatpush1.bf16.msra.mxu0 0
        %1254 = vmatprep.subr.bf16.mxu0 0
        %1255 = vmatpush1.bf16.msra.mxu0 0
        %1256 = vmatprep.subr.bf16.mxu0 0
        %1257 = vmatpush1.bf16.msra.mxu0 0
        %1258 = vmatprep.subr.bf16.mxu0 0
        %1259 = vmatpush1.bf16.msra.mxu0 0
        %1260 = vmatprep.subr.bf16.mxu0 0
        %1261 = vmatpush1.bf16.msra.mxu0 0
        %1262 = vmatprep.subr.bf16.mxu0 0
        %1263 = vmatpush1.bf16.msra.mxu0 0
        %1264 = vmatprep.subr.bf16.mxu0 0
        %1265 = vmatpush1.bf16.msra.mxu0 0
        %1266 = vmatprep.subr.bf16.mxu0 0
        %1267 = vmatpush1.bf16.msra.mxu0 0
        %1268 = vmatprep.mubr.bf16.mxu0 0
        %1269 = vmatmul.mubr.bf16.gmra.mrb[0].mxu0 %v1221
        %v1270 = vpop.f32.mrb[0].mxu0
        %v1271 = vadd.f32 0.0, %v1270
        %v1272 = vpop.f32.mrb[0].mxu0
        %v1273 = vpop.f32.mrb[0].mxu0
        %v1274 = vadd.f32 0.0, %v1273
        %v1275 = vpop.f32.mrb[0].mxu0
        %1276 = vmatprep.mubr.bf16.mxu0 0
        %1277 = vmatmul.mubr.bf16.gmra.mrb[0].mxu0 %v1224
        %v1278 = vpop.f32.mrb[0].mxu0
        %v1279 = vadd.f32 0.0, %v1278
        %v1280 = vpop.f32.mrb[0].mxu0
        %v1281 = vpop.f32.mrb[0].mxu0
        %v1282 = vadd.f32 0.0, %v1281
        %v1283 = vpop.f32.mrb[0].mxu0
        %1284 = vmatprep.mubr.bf16.mxu0 0
        %1285 = vmatmul.mubr.bf16.gmra.mrb[0].mxu0 %v1227
        %v1286 = vpop.f32.mrb[0].mxu0
        %v1287 = vadd.f32 0.0, %v1286
        %v1288 = vpop.f32.mrb[0].mxu0
        %v1289 = vpop.f32.mrb[0].mxu0
        %v1290 = vadd.f32 0.0, %v1289
        %v1291 = vpop.f32.mrb[0].mxu0
        %1292 = vmatprep.mubr.bf16.mxu0 0
        %1293 = vmatmul.mubr.bf16.gmra.mrb[0].mxu0 %v1230
        %v1294 = vpop.f32.mrb[0].mxu0
        %v1295 = vadd.f32 0.0, %v1294
        %v1296 = vpop.f32.mrb[0].mxu0
        %v1297 = vpop.f32.mrb[0].mxu0
        %v1298 = vadd.f32 0.0, %v1297
        %v1299 = vpop.f32.mrb[0].mxu0
        %1300 = vdwg.mxu0
        %v1301 = vrot.slane %v1017, 7
        %v1302 = vsel %vm1018, %v1301, 0
        %1304 = vmatprep.subr.mxu0 0.0
        %1305 = vmatpush1.msra.mxu0 %v1024
        %1306 = vmatprep.subr.mxu0 0.0
        %1307 = vmatpush1.msra.mxu0 0.0
        %1308 = vmatprep.subr.mxu0 0.0
        %1309 = vmatpush1.msra.mxu0 0.0
        %1310 = vmatprep.subr.mxu0 0.0
        %1311 = vmatpush1.msra.mxu0 0.0
        %1312 = vmatprep.subr.mxu0 0.0
        %1313 = vmatpush1.msra.mxu0 0.0
        %1314 = vmatprep.subr.mxu0 0.0
        %1315 = vmatpush1.msra.mxu0 0.0
        %1316 = vmatprep.subr.mxu0 0.0
        %1317 = vmatpush1.msra.mxu0 0.0
        %1318 = vmatprep.subr.mxu0 0.0
        %1319 = vmatpush1.msra.mxu0 0.0
        %1320 = vmatprep.subr.mxu0 0.0
        %1321 = vmatpush1.msra.mxu0 0.0
        %1322 = vmatprep.subr.mxu0 0.0
        %1323 = vmatpush1.msra.mxu0 0.0
        %1324 = vmatprep.subr.mxu0 0.0
        %1325 = vmatpush1.msra.mxu0 0.0
        %1326 = vmatprep.subr.mxu0 0.0
        %1327 = vmatpush1.msra.mxu0 0.0
        %1328 = vmatprep.subr.mxu0 0.0
        %1329 = vmatpush1.msra.mxu0 0.0
        %1330 = vmatprep.subr.mxu0 0.0
        %1331 = vmatpush1.msra.mxu0 0.0
        %1332 = vmatprep.subr.mxu0 0.0
        %1333 = vmatpush1.msra.mxu0 0.0
        %1334 = vmatprep.subr.mxu0 0.0
        %1335 = vmatpush1.msra.mxu0 0.0
        %1336 = vmatprep.subr.mxu0 0.0
        %1337 = vmatpush1.msra.mxu0 0.0
        %1338 = vmatprep.subr.mxu0 0.0
        %1339 = vmatpush1.msra.mxu0 0.0
        %1340 = vmatprep.subr.mxu0 0.0
        %1341 = vmatpush1.msra.mxu0 0.0
        %1342 = vmatprep.subr.mxu0 0.0
        %1343 = vmatpush1.msra.mxu0 0.0
        %1344 = vmatprep.subr.mxu0 0.0
        %1345 = vmatpush1.msra.mxu0 0.0
        %1346 = vmatprep.subr.mxu0 0.0
        %1347 = vmatpush1.msra.mxu0 0.0
        %1348 = vmatprep.subr.mxu0 0.0
        %1349 = vmatpush1.msra.mxu0 0.0
        %1350 = vmatprep.subr.mxu0 0.0
        %1351 = vmatpush1.msra.mxu0 0.0
        %1352 = vmatprep.subr.mxu0 0.0
        %1353 = vmatpush1.msra.mxu0 0.0
        %1354 = vmatprep.subr.mxu0 0.0
        %1355 = vmatpush1.msra.mxu0 0.0
        %1356 = vmatprep.subr.mxu0 0.0
        %1357 = vmatpush1.msra.mxu0 0.0
        %1358 = vmatprep.subr.mxu0 0.0
        %1359 = vmatpush1.msra.mxu0 0.0
        %1360 = vmatprep.subr.mxu0 0.0
        %1361 = vmatpush1.msra.mxu0 0.0
        %1362 = vmatprep.subr.mxu0 0.0
        %1363 = vmatpush1.msra.mxu0 0.0
        %1364 = vmatprep.subr.mxu0 0.0
        %1365 = vmatpush1.msra.mxu0 0.0
        %1366 = vmatprep.subr.mxu0 0.0
        %1367 = vmatpush1.msra.mxu0 0.0
        %1368 = vmatprep.mubr.f32.mxu0 0.0
        %1369 = vmatmul.mubr.f32.gmra.mrb[0].mxu0 %v1302
        %v1370 = vpop.f32.mrb[0].mxu0
        %v1371 = vadd.f32 0.0, %v1370
        %v1372 = vpop.f32.mrb[0].mxu0
        %1373 = vdwg.mxu0
        %v1374 = vlaneseq
        %v1375 = vshrl.u32 %v1374, 7
        %v1376 = vsub.s32 0, %v1375
        %v1377 = vrot.slane %v1371, %v1376
        %v1378 = vmul.f32 %v1377, %v964
        %v1379 = vmul.f32 %v1377, %v965
        %v1380 = vmul.f32 %v1377, %v966
        %v1381 = vmul.f32 %v1377, %v967
        %v1382 = vmul.f32 %v1377, %v968
        %v1383 = vmul.f32 %v1377, %v969
        %v1384 = vmul.f32 %v1377, %v970
        %v1385 = vmul.f32 %v1377, %v971
        %v1386 = vadd.f32 %v1378, %v1271
        %v1387 = vadd.f32 %v1379, %v1274
        %v1388 = vadd.f32 %v1380, %v1279
        %v1389 = vadd.f32 %v1381, %v1282
        %v1390 = vadd.f32 %v1382, %v1287
        %v1391 = vadd.f32 %v1383, %v1290
        %v1392 = vadd.f32 %v1384, %v1295
        %v1393 = vadd.f32 %v1385, %v1298
        %1394 = vst.msk [vmem:[#allocation2] sm:$0xff] %vm628, %v1386
        %1395 = vst.msk [vmem:[#allocation2 + $0x8] sm:$0xff] %vm628, %v1387
        %1396 = vst.msk [vmem:[#allocation2 + $0x10] sm:$0xff] %vm628, %v1388
        %1397 = vst.msk [vmem:[#allocation2 + $0x18] sm:$0xff] %vm628, %v1389
        %1398 = vst.msk [vmem:[#allocation2 + $0x20] sm:$0xff] %vm628, %v1390
        %1399 = vst.msk [vmem:[#allocation2 + $0x28] sm:$0xff] %vm628, %v1391
        %1400 = vst.msk [vmem:[#allocation2 + $0x30] sm:$0xff] %vm628, %v1392
        %1401 = vst.msk [vmem:[#allocation2 + $0x38] sm:$0xff] %vm628, %v1393
        %v1402 = vlog2.pop %v621
        %v1403 = vmul.f32 %v1402, 0.6931472
        %v1404 = vsub.f32 %v896, %v1403
        %1405 = vxpose.xlu0.b32.start [1/16] %v1404, 128
        %1406 = vxpose.xlu0.b32.cont [2/16] 0.0, 128
        %1407 = vxpose.xlu0.b32.cont [3/16] 0.0, 128
        %1408 = vxpose.xlu0.b32.cont [4/16] 0.0, 128
        %1409 = vxpose.xlu0.b32.cont [5/16] 0.0, 128
        %1410 = vxpose.xlu0.b32.cont [6/16] 0.0, 128
        %1411 = vxpose.xlu0.b32.cont [7/16] 0.0, 128
        %1412 = vxpose.xlu0.b32.cont [8/16] 0.0, 128
        %1413 = vxpose.xlu0.b32.cont [9/16] 0.0, 128
        %1414 = vxpose.xlu0.b32.cont [10/16] 0.0, 128
        %1415 = vxpose.xlu0.b32.cont [11/16] 0.0, 128
        %1416 = vxpose.xlu0.b32.cont [12/16] 0.0, 128
        %1417 = vxpose.xlu0.b32.cont [13/16] 0.0, 128
        %1418 = vxpose.xlu0.b32.cont [14/16] 0.0, 128
        %1419 = vxpose.xlu0.b32.cont [15/16] 0.0, 128
        %1420 = vxpose.xlu0.b32.end [16/16] 0.0, 128
        %v1421 = vpop.trf.xlu0
        %v1422 = vpop.trf.xlu0
        %v1423 = vpop.trf.xlu0
        %v1424 = vpop.trf.xlu0
        %v1425 = vpop.trf.xlu0
        %v1426 = vpop.trf.xlu0
        %v1427 = vpop.trf.xlu0
        %v1428 = vpop.trf.xlu0
        %v1429 = vpop.trf.xlu0
        %v1430 = vpop.trf.xlu0
        %v1431 = vpop.trf.xlu0
        %v1432 = vpop.trf.xlu0
        %v1433 = vpop.trf.xlu0
        %v1434 = vpop.trf.xlu0
        %v1435 = vpop.trf.xlu0
        %v1436 = vpop.trf.xlu0
        %1437 = vst.msk [vmem:[#allocation4] sm:$0xff] %vm1018, %v896
        %vm1438 = vcmask 58368
        %1439 = vst.msk [vmem:[#allocation5] sm:$0x3] %vm1438, %v1421
        %v1441 = vunpack.c.l.b16 %v808
        %v1442 = vunpack.c.h.b16 %v808
        %v1443 = vpack.c.b16 %v1441, %v1441
        %v1444 = vpack.c.b16 %v1442, %v1442
        %vm1445 = vsmask.f32 1280
        %vm1446 = vsmask.f32 5392
        %vm1447 = vmor %vm1445, %vm1446
        %v1449 = vshrl.u32 %v1443, 16
        %v1451 = vrot.slane %v1449, 6
        %v1452 = vshll.u32 %v1443, 16
        %v1454 = vrot.slane %v1452, 7
        %v1455 = vor.u32 %v1451, %v1454
        %v1456 = vrot.slane %v1455, 4
        %v1458 = vshrl.u32 %v1444, 16
        %v1460 = vrot.slane %v1458, 6
        %v1461 = vshll.u32 %v1444, 16
        %v1463 = vrot.slane %v1461, 7
        %v1464 = vor.u32 %v1460, %v1463
        %v1465 = vsel %vm1447, %v1456, %v1464
        %vm1467 = vcmask 519168
        %1468 = vst.msk [vmem:[#allocation6] sm:$0xf] %vm1467, %v1465
        %v1469 = vld [vmem:[#allocation4] sm:$0xff]
        %v1470 = vld [vmem:[#allocation5] sm:$0x3]
        %v1471 = vld [vmem:[#allocation6] sm:$0xf]
        %1473 = vset.pattern.permute.xlu0 0
        %1474 = vperm.xlu0 %1473, %v1469
        %v1475 = vpop.permute.xlu0 %1474
        %v1477 = vlaneseq
        %v1478 = vshrl.u32 %v1477, 7
        %v1479 = vsub.s32 0, %v1478
        %v1480 = vrot.slane %v1470, %v1479
        %v1481 = vsub.f32 %v1475, %v1480
        %v1482 = vadd.f32 %v1481, %v816
        %v1483 = vmul.f32 %v1482, 1.442695
        %v1484 = vpow.pop %v1483
        %v1485 = vmul.f32 %v959, %v1484
        %v1486 = vpack.c.bf16 %v1485, %v1485
        %v1488 = vsel %vm825, %v1486, 0
        %v1491 = vsel %vm1232, %v1471, 0
        %1493 = vmatprep.subr.bf16.mxu0 0
        %1494 = vmatpush1.bf16.msra.mxu0 %v1491
        %1495 = vmatprep.subr.bf16.mxu0 0
        %1496 = vmatpush1.bf16.msra.mxu0 0
        %1497 = vmatprep.subr.bf16.mxu0 0
        %1498 = vmatpush1.bf16.msra.mxu0 0
        %1499 = vmatprep.subr.bf16.mxu0 0
        %1500 = vmatpush1.bf16.msra.mxu0 0
        %1501 = vmatprep.subr.bf16.mxu0 0
        %1502 = vmatpush1.bf16.msra.mxu0 0
        %1503 = vmatprep.subr.bf16.mxu0 0
        %1504 = vmatpush1.bf16.msra.mxu0 0
        %1505 = vmatprep.subr.bf16.mxu0 0
        %1506 = vmatpush1.bf16.msra.mxu0 0
        %1507 = vmatprep.subr.bf16.mxu0 0
        %1508 = vmatpush1.bf16.msra.mxu0 0
        %1509 = vmatprep.subr.bf16.mxu0 0
        %1510 = vmatpush1.bf16.msra.mxu0 0
        %1511 = vmatprep.subr.bf16.mxu0 0
        %1512 = vmatpush1.bf16.msra.mxu0 0
        %1513 = vmatprep.subr.bf16.mxu0 0
        %1514 = vmatpush1.bf16.msra.mxu0 0
        %1515 = vmatprep.subr.bf16.mxu0 0
        %1516 = vmatpush1.bf16.msra.mxu0 0
        %1517 = vmatprep.subr.bf16.mxu0 0
        %1518 = vmatpush1.bf16.msra.mxu0 0
        %1519 = vmatprep.subr.bf16.mxu0 0
        %1520 = vmatpush1.bf16.msra.mxu0 0
        %1521 = vmatprep.subr.bf16.mxu0 0
        %1522 = vmatpush1.bf16.msra.mxu0 0
        %1523 = vmatprep.subr.bf16.mxu0 0
        %1524 = vmatpush1.bf16.msra.mxu0 0
        %1525 = vmatprep.mubr.bf16.mxu0 0
        %1526 = vmatmul.mubr.bf16.gmra.mrb[0].mxu0 %v1488
        %v1527 = vpop.f32.mrb[0].mxu0
        %v1528 = vadd.f32 0.0, %v1527
        %v1529 = vpop.f32.mrb[0].mxu0
        %v1530 = vpop.f32.mrb[0].mxu0
        %v1531 = vpop.f32.mrb[0].mxu0
        %1532 = vdwg.mxu0
        %1533 = vset.pattern.permute.xlu0 1
        %1534 = vperm.xlu0 %1533, %v1469
        %v1535 = vpop.permute.xlu0 %1534
        %v1537 = vlaneseq
        %v1538 = vshrl.u32 %v1537, 7
        %v1539 = vsub.s32 1, %v1538
        %v1540 = vrot.slane %v1470, %v1539
        %v1541 = vsub.f32 %v1535, %v1540
        %v1542 = vadd.f32 %v1541, %v816
        %v1543 = vmul.f32 %v1542, 1.442695
        %v1544 = vpow.pop %v1543
        %v1545 = vmul.f32 %v959, %v1544
        %v1546 = vpack.c.bf16 %v1545, %v1545
        %v1548 = vunpack.c.l.b16 %v1471
        %v1549 = vpack.c.b16 %v1548, %v1548
        %1550 = vrot.lane.b32.xlu0 %v1549, 96
        %v1551 = vpop.permute.xlu0 %1550
        %v1553 = vsel %vm825, %v1546, 0
        %v1556 = vsel %vm1232, %v1551, 0
        %1558 = vmatprep.subr.bf16.mxu0 0
        %1559 = vmatpush1.bf16.msra.mxu0 %v1556
        %1560 = vmatprep.subr.bf16.mxu0 0
        %1561 = vmatpush1.bf16.msra.mxu0 0
        %1562 = vmatprep.subr.bf16.mxu0 0
        %1563 = vmatpush1.bf16.msra.mxu0 0
        %1564 = vmatprep.subr.bf16.mxu0 0
        %1565 = vmatpush1.bf16.msra.mxu0 0
        %1566 = vmatprep.subr.bf16.mxu0 0
        %1567 = vmatpush1.bf16.msra.mxu0 0
        %1568 = vmatprep.subr.bf16.mxu0 0
        %1569 = vmatpush1.bf16.msra.mxu0 0
        %1570 = vmatprep.subr.bf16.mxu0 0
        %1571 = vmatpush1.bf16.msra.mxu0 0
        %1572 = vmatprep.subr.bf16.mxu0 0
        %1573 = vmatpush1.bf16.msra.mxu0 0
        %1574 = vmatprep.subr.bf16.mxu0 0
        %1575 = vmatpush1.bf16.msra.mxu0 0
        %1576 = vmatprep.subr.bf16.mxu0 0
        %1577 = vmatpush1.bf16.msra.mxu0 0
        %1578 = vmatprep.subr.bf16.mxu0 0
        %1579 = vmatpush1.bf16.msra.mxu0 0
        %1580 = vmatprep.subr.bf16.mxu0 0
        %1581 = vmatpush1.bf16.msra.mxu0 0
        %1582 = vmatprep.subr.bf16.mxu0 0
        %1583 = vmatpush1.bf16.msra.mxu0 0
        %1584 = vmatprep.subr.bf16.mxu0 0
        %1585 = vmatpush1.bf16.msra.mxu0 0
        %1586 = vmatprep.subr.bf16.mxu0 0
        %1587 = vmatpush1.bf16.msra.mxu0 0
        %1588 = vmatprep.subr.bf16.mxu0 0
        %1589 = vmatpush1.bf16.msra.mxu0 0
        %1590 = vmatprep.mubr.bf16.mxu0 0
        %1591 = vmatmul.mubr.bf16.gmra.mrb[0].mxu0 %v1553
        %v1592 = vpop.f32.mrb[0].mxu0
        %v1593 = vadd.f32 0.0, %v1592
        %v1594 = vpop.f32.mrb[0].mxu0
        %v1595 = vpop.f32.mrb[0].mxu0
        %v1596 = vpop.f32.mrb[0].mxu0
        %1597 = vdwg.mxu0
        %1599 = vrot.lane.b32.xlu0 %v1593, 32
        %v1600 = vpop.permute.xlu0 %1599
        %v1602 = vsel %vm520, %v1528, %v1600
        %1603 = vst.msk [vmem:[#allocation7] sm:$0xff] %vm628, %v1602
        %v1604 = vld [vmem:[#allocation7] sm:$0xff]
        %v1605 = vadd.f32 %v1604, %v1113
        %v1606 = vsub.f32 0.0, %v559
        %v1607 = vmul.f32 %v1606, 1.442695
        %v1608 = vpow.pop %v1607
        %v1609 = vadd.f32 %v1608, 1.0
        %v1610 = vrcp.pop %v1609
        %v1611 = vmul.f32 1.0, %v1610
        %v1612 = vmul.f32 %v559, %v1611
        %v1613 = vmul.f32 %v1605, %v1612
        %v1614 = vmul.f32 %v1613, %v1613
        %v1615 = vsel %vm628, %v1614, 0.0
        %1616 = vadd.xlane.f32.xlu0 %v1615
        %v1617 = vpop.xlane.xlu0 %1616
        %v1618 = vrcp.pop 64.0
        %v1619 = vmul.f32 %v1617, %v1618
        %v1620 = vadd.f32 %v1619, 1e-05
        %v1621 = vrsqrt.pop %v1620
        %v1622 = vmul.f32 %v1613, %v1621
        %v1623 = vld [vmem:[%s7] sm:$0x1]
        %v1625 = vlaneseq
        %v1626 = vshrl.u32 %v1625, 7
        %v1627 = vsub.s32 0, %v1626
        %v1628 = vrot.slane %v1623, %v1627
        %v1630 = vmul.f32 %v1622, %v1628
        %v1631 = vpack.c.bf16 %v1630, %v1630
        %v1632 = vld [vmem:[%s8] sm:$0xf]
        %v1633 = vld [vmem:[%s8 + $0x4] sm:$0xf]
        %v1634 = vld [vmem:[%s8 + $0x8] sm:$0xf]
        %v1635 = vld [vmem:[%s8 + $0xc] sm:$0xf]
        %v1636 = vld [vmem:[%s8 + $0x10] sm:$0xf]
        %v1637 = vld [vmem:[%s8 + $0x14] sm:$0xf]
        %v1638 = vld [vmem:[%s8 + $0x18] sm:$0xf]
        %v1639 = vld [vmem:[%s8 + $0x1c] sm:$0xf]
        %v1648 = vunpack.c.l.b16 %v1632
        %v1649 = vunpack.c.l.b16 %v1633
        %v1650 = vunpack.c.l.b16 %v1634
        %v1651 = vunpack.c.l.b16 %v1635
        %v1652 = vunpack.c.l.b16 %v1636
        %v1653 = vunpack.c.l.b16 %v1637
        %v1654 = vunpack.c.l.b16 %v1638
        %v1655 = vunpack.c.l.b16 %v1639
        %v1656 = vpack.c.b16 %v1649, %v1648
        %v1657 = vpack.c.b16 %v1651, %v1650
        %v1658 = vpack.c.b16 %v1653, %v1652
        %v1659 = vpack.c.b16 %v1655, %v1654
        %v1665 = vsel %vm628, %v1631, 0
        %1667 = vmatprep.subr.bf16.mxu0 0
        %1668 = vmatpush1.bf16.msra.mxu0 %v1656
        %1669 = vmatprep.subr.bf16.mxu0 0
        %1670 = vmatpush1.bf16.msra.mxu0 %v1657
        %1671 = vmatprep.subr.bf16.mxu0 0
        %1672 = vmatpush1.bf16.msra.mxu0 %v1658
        %1673 = vmatprep.subr.bf16.mxu0 0
        %1674 = vmatpush1.bf16.msra.mxu0 %v1659
        %1675 = vmatprep.subr.bf16.mxu0 0
        %1676 = vmatpush1.bf16.msra.mxu0 0
        %1677 = vmatprep.subr.bf16.mxu0 0
        %1678 = vmatpush1.bf16.msra.mxu0 0
        %1679 = vmatprep.subr.bf16.mxu0 0
        %1680 = vmatpush1.bf16.msra.mxu0 0
        %1681 = vmatprep.subr.bf16.mxu0 0
        %1682 = vmatpush1.bf16.msra.mxu0 0
        %1683 = vmatprep.subr.bf16.mxu0 0
        %1684 = vmatpush1.bf16.msra.mxu0 0
        %1685 = vmatprep.subr.bf16.mxu0 0
        %1686 = vmatpush1.bf16.msra.mxu0 0
        %1687 = vmatprep.subr.bf16.mxu0 0
        %1688 = vmatpush1.bf16.msra.mxu0 0
        %1689 = vmatprep.subr.bf16.mxu0 0
        %1690 = vmatpush1.bf16.msra.mxu0 0
        %1691 = vmatprep.subr.bf16.mxu0 0
        %1692 = vmatpush1.bf16.msra.mxu0 0
        %1693 = vmatprep.subr.bf16.mxu0 0
        %1694 = vmatpush1.bf16.msra.mxu0 0
        %1695 = vmatprep.subr.bf16.mxu0 0
        %1696 = vmatpush1.bf16.msra.mxu0 0
        %1697 = vmatprep.subr.bf16.mxu0 0
        %1698 = vmatpush1.bf16.msra.mxu0 0
        %1699 = vmatprep.mubr.bf16.mxu0 0
        %1700 = vmatmul.mubr.bf16.gmra.mrb[0].mxu0 %v1665
        %v1701 = vpop.f32.mrb[0].mxu0
        %v1702 = vadd.f32 %v478, %v1701
        %v1703 = vpop.f32.mrb[0].mxu0
        %v1704 = vpop.f32.mrb[0].mxu0
        %v1705 = vpop.f32.mrb[0].mxu0
        %1706 = vdwg.mxu0
        %v1707 = vsel %vm520, %v1702, 0.0
        %1708 = vadd.xlane.f32.xlu0 %v1707
        %v1709 = vpop.xlane.xlu0 %1708
        %v1710 = vrcp.pop 32.0
        %v1711 = vmul.f32 %v1709, %v1710
        %v1712 = vsub.f32 %v1702, %v1711
        %v1713 = vmul.f32 %v1712, %v1712
        %v1714 = vsel %vm520, %v1713, 0.0
        %1715 = vadd.xlane.f32.xlu0 %v1714
        %v1716 = vpop.xlane.xlu0 %1715
        %v1717 = vmul.f32 %v1716, %v1710
        %v1718 = vadd.f32 %v1717, 1e-05
        %v1719 = vrsqrt.pop %v1718
        %v1720 = vmul.f32 %v1712, %v1719
        %v1721 = vld [vmem:[%s9] sm:$0x1]
        %v1723 = vlaneseq
        %v1724 = vshrl.u32 %v1723, 7
        %v1725 = vsub.s32 0, %v1724
        %v1726 = vrot.slane %v1721, %v1725
        %v1728 = vmul.f32 %v1720, %v1726
        %v1729 = vld [vmem:[%s10] sm:$0x1]
        %v1731 = vlaneseq
        %v1732 = vshrl.u32 %v1731, 7
        %v1733 = vsub.s32 0, %v1732
        %v1734 = vrot.slane %v1729, %v1733
        %v1736 = vadd.f32 %v1728, %v1734
        %1737 = vst.msk [vmem:[%s459] sm:$0xff] %vm520, %v1736
        %s1738 = sand.u32 %s311, 1
        %s1739 = scalar_lea.sflag [#allocation10], %s1738
        %s1740 = sand.u32 %s311, 1
        %s1741 = smul.addr %s1740, 8
        %s1742 = scalar_lea.vmem [#allocation13], %s1741
        // Predicated region
        $region81: #{tpu_custom_call.1} parent=67 // pred_check
          %p1743 = pneg %p321
        $region82: #{tpu_custom_call.1} parent=67 // pred_check_branch
          %1745 = sbr.rel (%p1743) target = $region84
        $region83: #{tpu_custom_call.1} parent=67 // pred_region
          %s1747 = ssub.s32 128, 128
          %1748 = vsyncadd %s1739, %s1747
          %s1749 = smul.addr %s34, 2
          %s1750 = sadd.s32 %s35, %s1749
          %s1751 = smul.addr %s1750, 128
          %s1752 = scalar_lea.hbm %s12, %s1751
          %s1754 = sshll.u32 %s1742, 4
          %s1755 = int_to_ptr.vmem [resolvable:$true] %s1754
          %1757 = dma.vmem_to_hbm [thread:$0]  %s1755, 128, %s1752, %s1739
        $region84: #{tpu_custom_call.1} parent=67 // pred_fallthru
          _
      $region68: #{tpu_custom_call.1} parent=5 // pred_fallthru
        _
      %p1758 = scmp.le.s32.totalorder 2, %s25
      // Predicated region
      $region85: #{tpu_custom_call.1} parent=5 // pred_check
        %p1759 = pneg %p1758
      $region86: #{tpu_custom_call.1} parent=5 // pred_check_branch
        %1761 = sbr.rel (%p1759) target = $region88
      $region87: #{tpu_custom_call.1} parent=5 // pred_region
        %s1762 = ssub.s32 %s25, 2
        // Predicated region
        $region89: #{tpu_custom_call.1} parent=87 // pred_check
          %p1763 = pneg %p327
        $region90: #{tpu_custom_call.1} parent=87 // pred_check_branch
          %1765 = sbr.rel (%p1763) target = $region92
        $region91: #{tpu_custom_call.1} parent=87 // pred_region
          %s1766 = sand.u32 %s312, 1
          %s1767 = scalar_lea.sflag [#allocation10], %s1766
          %s1768 = sand.u32 %s312, 1
          %s1769 = smul.addr %s1768, 8
          %s1770 = scalar_lea.vmem [#allocation13], %s1769
          %1771 = dma.done %s1767, 128
        $region92: #{tpu_custom_call.1} parent=87 // pred_fallthru
          _
      $region88: #{tpu_custom_call.1} parent=5 // pred_fallthru
        _
    $region6: #{tpu_custom_call.1} parent=1 // loop_footer
      %s29 = sadd.s32 1, %s25
    $region7: #{tpu_custom_call.1} parent=1 // loop_footer_branch
      %24 = sbr.rel target = $region3
    $region8: #{tpu_custom_call.1} parent=1 // loop_exit
      _
    %1772 = vsyncpa [#allocation9], 1
    %s1773 = scalar_lea.sflag [#allocation9], 1
    %1774 = vsyncpa %s1773, 1
    %1775 = vsyncpa [#allocation12], 1
    %1776 = vsyncpa [#allocation10], 1
    %s1777 = scalar_lea.sflag [#allocation10], 1
    %1778 = vsyncpa %s1777, 1

</llo_original>
